<compile_context>
chip_gen: v7x
topology: tpu7x:2x2x1
jax: 0.10.0
libtpu: 0.0.40
codegen_flags: <defaults>
</compile_context>

<pallas_src>
import jax
import jax.numpy as jnp
from jax.experimental import pallas as pl
from jax.experimental.pallas import tpu as pltpu


# --------------------------------------------------------------------------- #
# Kernel                                                                      #
# --------------------------------------------------------------------------- #
def _matmul_bn_add_kernel(p_ref, w_ref, b_ref, x2_ref, o_ref, acc_ref):
    """Grid = (M/tm, N/tn, K/tk); K is the last ('arbitrary') axis.

    acc_ref is a float32 VMEM accumulator persisting across the K steps of one
    (i, j) output tile."""
    k = pl.program_id(2)

    @pl.when(k == 0)
    def _():
        acc_ref[...] = jnp.zeros_like(acc_ref)

    acc_ref[...] += jnp.dot(
        p_ref[...], w_ref[...], preferred_element_type=jnp.float32
    )

    @pl.when(k == pl.num_programs(2) - 1)
    def _():
        res = acc_ref[...] + b_ref[...] + x2_ref[...].astype(jnp.float32)
        o_ref[...] = res.astype(o_ref.dtype)


# --------------------------------------------------------------------------- #
# Tiling / VMEM policy                                                        #
# --------------------------------------------------------------------------- #
def _round_up(x, m):
    return ((x + m - 1) // m) * m


def _vmem_limit_bytes():
    """Generation-aware VMEM limit: ~48 MiB on v7x (64 MiB/TC), ~96 MiB on
    v5e/v6e (128 MiB).  Conservative fallback if the query fails."""
    cap = 64 * 1024 * 1024
    try:
        info = pltpu.get_tpu_info()
        cap = int(getattr(info, "vmem_capacity_bytes", cap))
    except Exception:
        pass
    return max(32 * 1024 * 1024, min(cap - 16 * 1024 * 1024, 96 * 1024 * 1024))


def _pick_tiles(M, K, N, in_itemsize, io_itemsize, out_itemsize, vmem_limit):
    """M is a multiple of 8, K/N are multiples of 128 (padded by the wrapper).

    Returns (tm, tk, tn, resident, footprint_bytes, budget_bytes)."""
    # Keep the whole folded weight resident in VMEM when it is small: the
    # weight is then DMA'd once (single pipeline buffer) instead of being
    # re-streamed once per M tile.
    weight_bytes = K * N * in_itemsize
    resident = weight_bytes <= 6 * 1024 * 1024
    if resident:
        tk, tn = K, N
    else:
        tn = 256 if N % 256 == 0 else 128
        if K % 512 == 0:
            tk = 512
        elif K % 256 == 0:
            tk = 256
        else:
            tk = 128

    def footprint(tm):
        patches = 2 * tm * tk * in_itemsize          # double-buffered stream
        weight = (1 if resident else 2) * tk * tn * in_itemsize
        bias = 2 * tn * 4
        resid = 2 * tm * tn * io_itemsize
        out = 2 * tm * tn * out_itemsize
        acc = tm * tn * 4
        return patches + weight + bias + resid + out + acc

    budget = int(vmem_limit * 0.7)
    # Grow tm toward the VMEM budget (per-step overhead ~0.35 us and weight
    # re-streaming both scale with the number of M tiles).
    tm = min(M, 2048 if in_itemsize <= 2 else 1024)
    tm = max(8, (tm // 8) * 8)
    while tm > 8 and footprint(tm) > budget:
        tm = max(8, ((tm // 2) // 8) * 8)
    return tm, tk, tn, resident, footprint(tm), budget


# --------------------------------------------------------------------------- #
# pallas_call wrapper                                                         #
# --------------------------------------------------------------------------- #
def _fused_matmul_bias_add(patches, w_t, bias, x2_flat, out_dtype):
    """out = patches @ w_t + bias + x2_flat, tiled over (M, N, K)."""
    M, K = patches.shape
    K2, N = w_t.shape
    assert K == K2 and x2_flat.shape == (M, N) and bias.shape == (N,)

    in_itemsize = jnp.dtype(patches.dtype).itemsize
    io_itemsize = jnp.dtype(x2_flat.dtype).itemsize
    out_itemsize = jnp.dtype(out_dtype).itemsize
    vmem_limit = _vmem_limit_bytes()

    tm, tk, tn, resident, used_bytes, budget = _pick_tiles(
        M, K, N, in_itemsize, io_itemsize, out_itemsize, vmem_limit
    )
    grid = (pl.cdiv(M, tm), N // tn, K // tk)

    bias2d = bias.reshape(1, N).astype(jnp.float32)

    # Blocks whose index_map is constant over the whole grid only need a single
    # pipeline buffer -> DMA'd once and kept resident in VMEM.
    w_kwargs = (
        dict(pipeline_mode=pl.Buffered(1))
        if (grid[1] == 1 and grid[2] == 1)
        else {}
    )
    b_kwargs = dict(pipeline_mode=pl.Buffered(1)) if grid[1] == 1 else {}

    # Long K pipelines with spare VMEM: deepen buffering of the dominant
    # (patches) stream to hide exposed DMA latency (mainly helps v5e).
    p_kwargs = {}
    if grid[2] >= 4 and used_bytes + tm * tk * in_itemsize <= budget:
        p_kwargs = dict(pipeline_mode=pl.Buffered(3))

    # Honest HBM traffic estimate: weight tiles are re-streamed once per M tile
    # unless they stay resident (grid[1] == grid[2] == 1).
    w_reads = 1 if (grid[1] == 1 and grid[2] == 1) else grid[0]
    cost = pl.CostEstimate(
        flops=2 * M * K * N,
        transcendentals=0,
        bytes_accessed=M * K * in_itemsize
        + w_reads * K * N * in_itemsize
        + N * 4
        + M * N * io_itemsize
        + M * N * out_itemsize,
    )

    return pl.pallas_call(
        _matmul_bn_add_kernel,
        out_shape=jax.ShapeDtypeStruct((M, N), out_dtype),
        grid_spec=pltpu.PrefetchScalarGridSpec(
            num_scalar_prefetch=0,
            grid=grid,
            in_specs=[
                pl.BlockSpec((tm, tk), lambda i, j, k: (i, k), **p_kwargs),   # patches
                pl.BlockSpec((tk, tn), lambda i, j, k: (k, j), **w_kwargs),   # weight
                pl.BlockSpec((1, tn), lambda i, j, k: (0, j), **b_kwargs),    # bias
                pl.BlockSpec((tm, tn), lambda i, j, k: (i, j)),               # residual
            ],
            out_specs=pl.BlockSpec((tm, tn), lambda i, j, k: (i, j)),
            scratch_shapes=[pltpu.VMEM((tm, tn), jnp.float32)],
        ),
        compiler_params=pltpu.CompilerParams(
            dimension_semantics=("parallel", "parallel", "arbitrary"),
            vmem_limit_bytes=vmem_limit,
        ),
        cost_estimate=cost,
    )(patches, w_t, bias2d, x2_flat)


# --------------------------------------------------------------------------- #
# Public op: ConvBNAdd2d forward                                              #
# --------------------------------------------------------------------------- #
def conv_bn_add_2d(
    x1,
    x2,
    conv_weight,
    conv_bias,
    bn_gamma,
    bn_beta,
    bn_running_mean,
    bn_running_var,
    *,
    stride=(1, 1),
    padding=(1, 1),
    eps=1e-5,
    compute_dtype=jnp.bfloat16,
):
    """out = BatchNorm2d(Conv2d(x1)) + x2   (NCHW layouts, PyTorch conventions).

    x1:          (B, Cin, H, W)
    x2:          (B, Cout, Ho, Wo)
    conv_weight: (Cout, Cin, kh, kw);  conv_bias: (Cout,) or None
    compute_dtype: matmul operand dtype (default bf16 -> native MXU dtype and
                   half the HBM traffic of the two large streams); accumulation,
                   bias and residual math stay float32. Pass jnp.float32 (or
                   None) for full-f32 operands.
    """
    B, Cin, H, W = x1.shape
    Cout, Cin2, kh, kw = conv_weight.shape
    assert Cin == Cin2
    sh, sw = stride
    ph, pw = padding
    Ho = (H + 2 * ph - kh) // sh + 1
    Wo = (W + 2 * pw - kw) // sw + 1
    assert x2.shape == (B, Cout, Ho, Wo)

    if compute_dtype is None:
        compute_dtype = x1.dtype

    # ---- Fold eval-mode BatchNorm into the conv weight / bias (f32) --------
    scale = bn_gamma / jnp.sqrt(bn_running_var + eps)            # (Cout,)
    w_folded = conv_weight * scale[:, None, None, None]          # (Cout,Cin,kh,kw)
    b_folded = bn_beta - bn_running_mean * scale
    if conv_bias is not None:
        b_folded = b_folded + conv_bias * scale

    M = B * Ho * Wo
    K = kh * kw * Cin
    N = Cout
    M_pad = _round_up(M, 8)
    K_pad = _round_up(K, 128)
    N_pad = _round_up(N, 128)

    # ---- im2col (wrapper-side, plain JAX) ----------------------------------
    # Emitted directly in compute_dtype (halves the intermediate's HBM traffic)
    # and with zero-padded K so the kernel sees lane-dense blocks; zero columns
    # times zero weight rows contribute nothing to the accumulation.
    x_nhwc = jnp.transpose(x1, (0, 2, 3, 1)).astype(compute_dtype)   # (B,H,W,Cin)
    x_sp = jnp.pad(x_nhwc, ((0, 0), (ph, ph), (pw, pw), (0, 0)))
    slices = []
    for ih in range(kh):
        for iw in range(kw):
            slices.append(
                x_sp[
                    :,
                    ih : ih + sh * (Ho - 1) + 1 : sh,
                    iw : iw + sw * (Wo - 1) + 1 : sw,
                    :,
                ]
            )
    if K_pad > K:
        slices.append(jnp.zeros((B, Ho, Wo, K_pad - K), dtype=compute_dtype))
    patches = jnp.concatenate(slices, axis=-1).reshape(M, K_pad)
    if M_pad > M:
        patches = jnp.pad(patches, ((0, M_pad - M), (0, 0)))

    # Folded weight -> (K_pad, N_pad) with the same (kh, kw, Cin) ordering.
    w_t = jnp.transpose(w_folded, (2, 3, 1, 0)).reshape(K, N).astype(compute_dtype)
    w_t = jnp.pad(w_t, ((0, K_pad - K), (0, N_pad - N)))
    b_p = jnp.pad(b_folded.astype(jnp.float32), (0, N_pad - N))

    x2_flat = jnp.transpose(x2, (0, 2, 3, 1)).reshape(M, N)
    x2_flat = jnp.pad(x2_flat, ((0, M_pad - M), (0, N_pad - N)))

    out_flat = _fused_matmul_bias_add(patches, w_t, b_p, x2_flat, x1.dtype)

    out = out_flat[:M, :N].reshape(B, Ho, Wo, Cout)
    return jnp.transpose(out, (0, 3, 1, 2))                      # (B,Cout,Ho,Wo)


# --------------------------------------------------------------------------- #
# Reference + self-test                                                       #
# --------------------------------------------------------------------------- #
def _reference(x1, x2, w, b, gamma, beta, mean, var, stride, padding, eps):
    conv = jax.lax.conv_general_dilated(
        x1,
        w,
        window_strides=stride,
        padding=[(padding[0], padding[0]), (padding[1], padding[1])],
        dimension_numbers=("NCHW", "OIHW", "NCHW"),
        precision=jax.lax.Precision.HIGHEST,
    )
    if b is not None:
        conv = conv + b[None, :, None, None]
    bn = (conv - mean[None, :, None, None]) * (
        gamma / jnp.sqrt(var + eps)
    )[None, :, None, None] + beta[None, :, None, None]
    return bn + x2


if __name__ == "__main__":
    key = jax.random.PRNGKey(0)

    def run_case(B, Cin, H, W, Cout, ksz, stride, padding, use_bias, key,
                 compute_dtype, atol, rtol):
        ks = jax.random.split(key, 8)
        sh, sw = stride
        ph, pw = padding
        Ho = (H + 2 * ph - ksz) // sh + 1
        Wo = (W + 2 * pw - ksz) // sw + 1

        x1 = jax.random.normal(ks[0], (B, Cin, H, W), dtype=jnp.float32)
        x2 = jax.random.normal(ks[1], (B, Cout, Ho, Wo), dtype=jnp.float32)

        fan_in = Cin * ksz * ksz
        bound = 1.0 / jnp.sqrt(jnp.float32(fan_in))
        w = jax.random.uniform(
            ks[2], (Cout, Cin, ksz, ksz), minval=-bound, maxval=bound, dtype=jnp.float32
        )
        b = (
            jax.random.uniform(ks[3], (Cout,), minval=-bound, maxval=bound, dtype=jnp.float32)
            if use_bias
            else None
        )
        gamma = jax.random.uniform(ks[4], (Cout,), minval=0.5, maxval=1.5, dtype=jnp.float32)
        beta = 0.1 * jax.random.normal(ks[5], (Cout,), dtype=jnp.float32)
        mean = 0.1 * jax.random.normal(ks[6], (Cout,), dtype=jnp.float32)
        var = jax.random.uniform(ks[7], (Cout,), minval=0.5, maxval=1.5, dtype=jnp.float32)
        eps = 1e-5

        out = conv_bn_add_2d(
            x1, x2, w, b, gamma, beta, mean, var,
            stride=stride, padding=padding, eps=eps, compute_dtype=compute_dtype,
        )
        out = jax.block_until_ready(out)

        ref = _reference(x1, x2, w, b, gamma, beta, mean, var, stride, padding, eps)
        assert out.shape == (B, Cout, Ho, Wo)
        assert jnp.allclose(out, ref, atol=atol, rtol=rtol), (
            float(jnp.max(jnp.abs(out - ref)))
        )

    k1, k2, k3 = jax.random.split(key, 3)
    # Case 1: small Cout=8 (N padded to 128), stride 1, conv bias, f32 operands
    #         -> exact-semantics path, tight tolerance.
    run_case(B=2, Cin=4, H=16, W=16, Cout=8, ksz=3, stride=(1, 1), padding=(1, 1),
             use_bias=True, key=k1, compute_dtype=jnp.float32, atol=1e-3, rtol=1e-3)
    # Case 2: lane-dense Cout=128, stride 2, no conv bias, default bf16 operands.
    run_case(B=2, Cin=8, H=16, W=16, Cout=128, ksz=3, stride=(2, 2), padding=(1, 1),
             use_bias=False, key=k2, compute_dtype=jnp.bfloat16, atol=5e-2, rtol=5e-2)
    # Case 3: Cout=48 (N padded), Cin=16 (K padded to 256), default bf16, bias.
    run_case(B=2, Cin=16, H=16, W=16, Cout=48, ksz=3, stride=(1, 1), padding=(1, 1),
             use_bias=True, key=k3, compute_dtype=jnp.bfloat16, atol=5e-2, rtol=5e-2)

    print("KERNEL_OK")
</pallas_src>

<mosaic_0001>
module attributes {stable_mosaic.version = 11 : i64} {
  func.func @_matmul_bn_add_kernel(%arg0: i32, %arg1: i32, %arg2: i32, %arg3: memref<512x128xf32, #tpu.memory_space<vmem>>, %arg4: memref<128x128xf32, #tpu.memory_space<vmem>>, %arg5: memref<1x128xf32, #tpu.memory_space<vmem>>, %arg6: memref<512x128xf32, #tpu.memory_space<vmem>>, %arg7: memref<512x128xf32, #tpu.memory_space<vmem>>, %arg8: memref<512x128xf32, #tpu.memory_space<vmem>>) attributes {dimension_semantics = [#tpu.dimension_semantics<parallel>, #tpu.dimension_semantics<parallel>, #tpu.dimension_semantics<arbitrary>], iteration_bounds = array<i64: 1, 1, 1>, scalar_prefetch = 0 : i64, scratch_operands = 1 : i64, tpu.core_type = #tpu.core_type<tc>, window_params = [{transform_indices = @transform_0, window_bounds = array<i64: 512, 128>}, {pipeline_mode = #tpu.pipeline_mode<synchronous>, transform_indices = @transform_1, window_bounds = array<i64: 128, 128>}, {pipeline_mode = #tpu.pipeline_mode<synchronous>, transform_indices = @transform_2, window_bounds = array<i64: 1, 128>}, {transform_indices = @transform_3, window_bounds = array<i64: 512, 128>}, {transform_indices = @transform_4, window_bounds = array<i64: 512, 128>}]} {
    %c0_i32 = arith.constant 0 : i32
    %0 = arith.cmpi eq, %arg2, %c0_i32 : i32
    %1 = arith.extui %0 : i1 to i32
    %c0_i32_0 = arith.constant 0 : i32
    %2 = arith.cmpi ne, %1, %c0_i32_0 : i32
    scf.if %2 {
      %cst_10 = arith.constant 0.000000e+00 : f32
      %12 = vector.broadcast %cst_10 : f32 to vector<512x128xf32>
      %c0_11 = arith.constant 0 : index
      %c0_12 = arith.constant 0 : index
      %13 = vector.load %arg8[%c0_11, %c0_12] : memref<512x128xf32, #tpu.memory_space<vmem>>, vector<512x128xf32>
      tpu.vector_store %arg8[%c0_11, %c0_12], %12 {strides = array<i32>} : memref<512x128xf32, #tpu.memory_space<vmem>>, vector<512x128xf32>,
    } else {
    }
    %c0 = arith.constant 0 : index
    %c0_1 = arith.constant 0 : index
    %3 = vector.load %arg8[%c0, %c0_1] : memref<512x128xf32, #tpu.memory_space<vmem>>, vector<512x128xf32>
    %c0_2 = arith.constant 0 : index
    %c0_3 = arith.constant 0 : index
    %4 = vector.load %arg3[%c0_2, %c0_3] : memref<512x128xf32, #tpu.memory_space<vmem>>, vector<512x128xf32>
    %c0_4 = arith.constant 0 : index
    %c0_5 = arith.constant 0 : index
    %5 = vector.load %arg4[%c0_4, %c0_5] : memref<128x128xf32, #tpu.memory_space<vmem>>, vector<128x128xf32>
    %cst = arith.constant dense<0.000000e+00> : vector<512x128xf32>
    %6 = tpu.matmul %4, %5, %cst {dimension_numbers = #tpu.dot_dimension_numbers<[1], [0], [0], [1], [0, 0, 1, 1], [], []>} : vector<512x128xf32>, vector<128x128xf32>, vector<512x128xf32> -> vector<512x128xf32>
    %7 = arith.addf %3, %6 : vector<512x128xf32>
    %c0_6 = arith.constant 0 : index
    %c0_7 = arith.constant 0 : index
    %8 = vector.load %arg8[%c0_6, %c0_7] : memref<512x128xf32, #tpu.memory_space<vmem>>, vector<512x128xf32>
    tpu.vector_store %arg8[%c0_6, %c0_7], %7 {strides = array<i32>} : memref<512x128xf32, #tpu.memory_space<vmem>>, vector<512x128xf32>,
    %c0_i32_8 = arith.constant 0 : i32
    %9 = arith.cmpi eq, %arg2, %c0_i32_8 : i32
    %10 = arith.extui %9 : i1 to i32
    %c0_i32_9 = arith.constant 0 : i32
    %11 = arith.cmpi ne, %10, %c0_i32_9 : i32
    scf.if %11 {
      %c0_10 = arith.constant 0 : index
      %c0_11 = arith.constant 0 : index
      %12 = vector.load %arg8[%c0_10, %c0_11] : memref<512x128xf32, #tpu.memory_space<vmem>>, vector<512x128xf32>
      %c0_12 = arith.constant 0 : index
      %c0_13 = arith.constant 0 : index
      %13 = vector.load %arg5[%c0_12, %c0_13] : memref<1x128xf32, #tpu.memory_space<vmem>>, vector<1x128xf32>
      %14 = vector.broadcast %13 : vector<1x128xf32> to vector<512x128xf32>
      %15 = arith.addf %12, %14 : vector<512x128xf32>
      %c0_14 = arith.constant 0 : index
      %c0_15 = arith.constant 0 : index
      %16 = vector.load %arg6[%c0_14, %c0_15] : memref<512x128xf32, #tpu.memory_space<vmem>>, vector<512x128xf32>
      %17 = arith.addf %15, %16 : vector<512x128xf32>
      %c0_16 = arith.constant 0 : index
      %c0_17 = arith.constant 0 : index
      %18 = vector.load %arg7[%c0_16, %c0_17] : memref<512x128xf32, #tpu.memory_space<vmem>>, vector<512x128xf32>
      tpu.vector_store %arg7[%c0_16, %c0_17], %17 {strides = array<i32>} : memref<512x128xf32, #tpu.memory_space<vmem>>, vector<512x128xf32>,
    } else {
    }
    return
  }
  func.func @transform_0(%arg0: i32, %arg1: i32, %arg2: i32) -> (i32, i32) {
    %c0_i32 = arith.constant 0 : i32
    return %arg0, %arg2 : i32, i32
  }
  func.func @transform_1(%arg0: i32, %arg1: i32, %arg2: i32) -> (i32, i32) {
    %c0_i32 = arith.constant 0 : i32
    return %arg2, %arg1 : i32, i32
  }
  func.func @transform_2(%arg0: i32, %arg1: i32, %arg2: i32) -> (i32, i32) {
    %c0_i32 = arith.constant 0 : i32
    %c0_i32_0 = arith.constant 0 : i32
    return %c0_i32, %arg1 : i32, i32
  }
  func.func @transform_3(%arg0: i32, %arg1: i32, %arg2: i32) -> (i32, i32) {
    %c0_i32 = arith.constant 0 : i32
    return %arg0, %arg1 : i32, i32
  }
  func.func @transform_4(%arg0: i32, %arg1: i32, %arg2: i32) -> (i32, i32) {
    %c0_i32 = arith.constant 0 : i32
    return %arg0, %arg1 : i32, i32
  }
}

</mosaic_0001>

<llo_original>
// kernel: tpu_custom_call.1
$region0: #{tpu_custom_call.1}
  #allocation0 [shape = 'u32[]', space=smem, size = 0x4, offset = 0x4, fixed_abs, tag = 'smem constant byte address 0x4 - core index']
  #allocation1 [shape = 'u32[144,128]{1,0:T(1,128)}', space=vmem, size = 0x12000, scoped, tag = 'internal scratch']
  #allocation2 [shape = 'f32[512,128]{1,0:T(8,128)}', space=vmem, size = 0x40000, scoped, tag = 'scratch operand']
  %s0 = inlined_call_operand.hbm [shape: f32[512,128], index: 0, kind: input, shape index: {}]
  %s1 = inlined_call_operand.hbm [shape: f32[128,128], index: 1, kind: input, shape index: {}]
  %s2 = inlined_call_operand.vmem [shape: f32[1,128], index: 2, kind: input, shape index: {}]
  %s3 = inlined_call_operand.hbm [shape: f32[512,128], index: 3, kind: input, shape index: {}]
  %s4 = inlined_call_operand.hbm [shape: f32[512,128], index: 4, kind: output, shape index: {}]
  %s5 = sld [smem:[#allocation0]]
  $region46: #{tpu_custom_call.1} parent=0
    _
  %s7 = ssub.s32 1, %s5
  %s8 = scalar_select 0, %s7, %s5
  $region1: #{tpu_custom_call.1} parent=0
    #allocation3 [shape = 'u8[262144]{0}', space=vmem, size = 0x40000, scoped, tag = 'input window, operand 0, single buffered']
    #allocation4 [shape = 's32[1]{0}', space=sflag, size = 0x4, scoped, tag = 'scoped memory for tpu_custom_call.1']
    #allocation5 [shape = 's32[1]{0}', space=sflag, size = 0x4, scoped, tag = 'scoped memory for tpu_custom_call.1']
    #allocation6 [shape = 'u8[65536]{0}', space=vmem, size = 0x10000, scoped, tag = 'input window, operand 1, single buffered']
    #allocation7 [shape = 's32[1]{0}', space=sflag, size = 0x4, scoped, tag = 'scoped memory for tpu_custom_call.1']
    #allocation8 [shape = 'u8[262144]{0}', space=vmem, size = 0x40000, scoped, tag = 'input window, operand 3, single buffered']
    #allocation9 [shape = 'u8[262144]{0}', space=vmem, size = 0x40000, scoped, tag = 'output window, operand 0, single buffered']
    %9 = vsyncpa [#allocation4], 0
    %10 = vsyncpa [#allocation7], 0
    %11 = vsyncpa [#allocation5], 0
    // Predicated region
    $region2: #{tpu_custom_call.1} parent=1 // pred_check
      _
    $region3: #{tpu_custom_call.1} parent=1 // pred_check_branch
      %13 = sbr.rel (0) target = $region5
    $region4: #{tpu_custom_call.1} parent=1 // pred_region
      %s15 = ssub.s32 8192, 8192
      %16 = vsyncadd [#allocation4], %s15
      %s17 = sshll.u32 [#allocation3], 4
      %s18 = int_to_ptr.vmem [resolvable:$true] %s17
      %23 = dma.hbm_to_vmem [thread:$0]  %s0, 8192, %s18, [#allocation4], 128, 128, 8
    $region5: #{tpu_custom_call.1} parent=1 // pred_fallthru
      _
    // Predicated region
    $region6: #{tpu_custom_call.1} parent=1 // pred_check
      _
    $region7: #{tpu_custom_call.1} parent=1 // pred_check_branch
      %25 = sbr.rel (0) target = $region9
    $region8: #{tpu_custom_call.1} parent=1 // pred_region
      %s27 = ssub.s32 2048, 2048
      %28 = vsyncadd [#allocation7], %s27
      %s29 = sshll.u32 [#allocation6], 4
      %s30 = int_to_ptr.vmem [resolvable:$true] %s29
      %35 = dma.hbm_to_vmem [thread:$0]  %s1, 2048, %s30, [#allocation7], 128, 128, 8
    $region9: #{tpu_custom_call.1} parent=1 // pred_fallthru
      _
    // Predicated region
    $region10: #{tpu_custom_call.1} parent=1 // pred_check
      _
    $region11: #{tpu_custom_call.1} parent=1 // pred_check_branch
      %37 = sbr.rel (0) target = $region13
    $region12: #{tpu_custom_call.1} parent=1 // pred_region
      _
    $region13: #{tpu_custom_call.1} parent=1 // pred_fallthru
      _
    // Predicated region
    $region14: #{tpu_custom_call.1} parent=1 // pred_check
      _
    $region15: #{tpu_custom_call.1} parent=1 // pred_check_branch
      %39 = sbr.rel (0) target = $region17
    $region16: #{tpu_custom_call.1} parent=1 // pred_region
      %s41 = ssub.s32 8192, 8192
      %42 = vsyncadd [#allocation7], %s41
      %s43 = sshll.u32 [#allocation8], 4
      %s44 = int_to_ptr.vmem [resolvable:$true] %s43
      %49 = dma.hbm_to_vmem [thread:$0]  %s3, 8192, %s44, [#allocation7], 128, 128, 8
    $region17: #{tpu_custom_call.1} parent=1 // pred_fallthru
      _
    // Predicated region
    $region18: #{tpu_custom_call.1} parent=1 // pred_check
      _
    $region19: #{tpu_custom_call.1} parent=1 // pred_check_branch
      %51 = sbr.rel (0) target = $region21
    $region20: #{tpu_custom_call.1} parent=1 // pred_region
      %52 = dma.done [#allocation4], 8192
    $region21: #{tpu_custom_call.1} parent=1 // pred_fallthru
      _
    // Predicated region
    $region22: #{tpu_custom_call.1} parent=1 // pred_check
      _
    $region23: #{tpu_custom_call.1} parent=1 // pred_check_branch
      %54 = sbr.rel (0) target = $region25
    $region24: #{tpu_custom_call.1} parent=1 // pred_region
      %55 = dma.done [#allocation7], 2048
    $region25: #{tpu_custom_call.1} parent=1 // pred_fallthru
      _
    // Predicated region
    $region26: #{tpu_custom_call.1} parent=1 // pred_check
      _
    $region27: #{tpu_custom_call.1} parent=1 // pred_check_branch
      %57 = sbr.rel (0) target = $region29
    $region28: #{tpu_custom_call.1} parent=1 // pred_region
      %58 = dma.done [#allocation7], 8192
    $region29: #{tpu_custom_call.1} parent=1 // pred_fallthru
      _
    %p59 = scmp.eq.s32.totalorder 0, 0
    // Predicated region
    $region30: #{tpu_custom_call.1} parent=1 // pred_check
      %p60 = pneg %p59
    $region31: #{tpu_custom_call.1} parent=1 // pred_check_branch
      %62 = sbr.rel (%p60) target = $region33
    $region32: #{tpu_custom_call.1} parent=1 // pred_region
      %63 = vst [vmem:[#allocation2] sm:$0xff] 0.0
      %64 = vst [vmem:[#allocation2 + $0x8] sm:$0xff] 0.0
      %65 = vst [vmem:[#allocation2 + $0x10] sm:$0xff] 0.0
      %66 = vst [vmem:[#allocation2 + $0x18] sm:$0xff] 0.0
      %67 = vst [vmem:[#allocation2 + $0x20] sm:$0xff] 0.0
      %68 = vst [vmem:[#allocation2 + $0x28] sm:$0xff] 0.0
      %69 = vst [vmem:[#allocation2 + $0x30] sm:$0xff] 0.0
      %70 = vst [vmem:[#allocation2 + $0x38] sm:$0xff] 0.0
      %71 = vst [vmem:[#allocation2 + $0x40] sm:$0xff] 0.0
      %72 = vst [vmem:[#allocation2 + $0x48] sm:$0xff] 0.0
      %73 = vst [vmem:[#allocation2 + $0x50] sm:$0xff] 0.0
      %74 = vst [vmem:[#allocation2 + $0x58] sm:$0xff] 0.0
      %75 = vst [vmem:[#allocation2 + $0x60] sm:$0xff] 0.0
      %76 = vst [vmem:[#allocation2 + $0x68] sm:$0xff] 0.0
      %77 = vst [vmem:[#allocation2 + $0x70] sm:$0xff] 0.0
      %78 = vst [vmem:[#allocation2 + $0x78] sm:$0xff] 0.0
      %79 = vst [vmem:[#allocation2 + $0x80] sm:$0xff] 0.0
      %80 = vst [vmem:[#allocation2 + $0x88] sm:$0xff] 0.0
      %81 = vst [vmem:[#allocation2 + $0x90] sm:$0xff] 0.0
      %82 = vst [vmem:[#allocation2 + $0x98] sm:$0xff] 0.0
      %83 = vst [vmem:[#allocation2 + $0xa0] sm:$0xff] 0.0
      %84 = vst [vmem:[#allocation2 + $0xa8] sm:$0xff] 0.0
      %85 = vst [vmem:[#allocation2 + $0xb0] sm:$0xff] 0.0
      %86 = vst [vmem:[#allocation2 + $0xb8] sm:$0xff] 0.0
      %87 = vst [vmem:[#allocation2 + $0xc0] sm:$0xff] 0.0
      %88 = vst [vmem:[#allocation2 + $0xc8] sm:$0xff] 0.0
      %89 = vst [vmem:[#allocation2 + $0xd0] sm:$0xff] 0.0
      %90 = vst [vmem:[#allocation2 + $0xd8] sm:$0xff] 0.0
      %91 = vst [vmem:[#allocation2 + $0xe0] sm:$0xff] 0.0
      %92 = vst [vmem:[#allocation2 + $0xe8] sm:$0xff] 0.0
      %93 = vst [vmem:[#allocation2 + $0xf0] sm:$0xff] 0.0
      %94 = vst [vmem:[#allocation2 + $0xf8] sm:$0xff] 0.0
      %95 = vst [vmem:[#allocation2 + $0x100] sm:$0xff] 0.0
      %96 = vst [vmem:[#allocation2 + $0x108] sm:$0xff] 0.0
      %97 = vst [vmem:[#allocation2 + $0x110] sm:$0xff] 0.0
      %98 = vst [vmem:[#allocation2 + $0x118] sm:$0xff] 0.0
      %99 = vst [vmem:[#allocation2 + $0x120] sm:$0xff] 0.0
      %100 = vst [vmem:[#allocation2 + $0x128] sm:$0xff] 0.0
      %101 = vst [vmem:[#allocation2 + $0x130] sm:$0xff] 0.0
      %102 = vst [vmem:[#allocation2 + $0x138] sm:$0xff] 0.0
      %103 = vst [vmem:[#allocation2 + $0x140] sm:$0xff] 0.0
      %104 = vst [vmem:[#allocation2 + $0x148] sm:$0xff] 0.0
      %105 = vst [vmem:[#allocation2 + $0x150] sm:$0xff] 0.0
      %106 = vst [vmem:[#allocation2 + $0x158] sm:$0xff] 0.0
      %107 = vst [vmem:[#allocation2 + $0x160] sm:$0xff] 0.0
      %108 = vst [vmem:[#allocation2 + $0x168] sm:$0xff] 0.0
      %109 = vst [vmem:[#allocation2 + $0x170] sm:$0xff] 0.0
      %110 = vst [vmem:[#allocation2 + $0x178] sm:$0xff] 0.0
      %111 = vst [vmem:[#allocation2 + $0x180] sm:$0xff] 0.0
      %112 = vst [vmem:[#allocation2 + $0x188] sm:$0xff] 0.0
      %113 = vst [vmem:[#allocation2 + $0x190] sm:$0xff] 0.0
      %114 = vst [vmem:[#allocation2 + $0x198] sm:$0xff] 0.0
      %115 = vst [vmem:[#allocation2 + $0x1a0] sm:$0xff] 0.0
      %116 = vst [vmem:[#allocation2 + $0x1a8] sm:$0xff] 0.0
      %117 = vst [vmem:[#allocation2 + $0x1b0] sm:$0xff] 0.0
      %118 = vst [vmem:[#allocation2 + $0x1b8] sm:$0xff] 0.0
      %119 = vst [vmem:[#allocation2 + $0x1c0] sm:$0xff] 0.0
      %120 = vst [vmem:[#allocation2 + $0x1c8] sm:$0xff] 0.0
      %121 = vst [vmem:[#allocation2 + $0x1d0] sm:$0xff] 0.0
      %122 = vst [vmem:[#allocation2 + $0x1d8] sm:$0xff] 0.0
      %123 = vst [vmem:[#allocation2 + $0x1e0] sm:$0xff] 0.0
      %124 = vst [vmem:[#allocation2 + $0x1e8] sm:$0xff] 0.0
      %125 = vst [vmem:[#allocation2 + $0x1f0] sm:$0xff] 0.0
      %126 = vst [vmem:[#allocation2 + $0x1f8] sm:$0xff] 0.0
    $region33: #{tpu_custom_call.1} parent=1 // pred_fallthru
      _
    %v127 = vld [vmem:[#allocation2] sm:$0xff]
    %v128 = vld [vmem:[#allocation2 + $0x8] sm:$0xff]
    %v129 = vld [vmem:[#allocation2 + $0x10] sm:$0xff]
    %v130 = vld [vmem:[#allocation2 + $0x18] sm:$0xff]
    %v131 = vld [vmem:[#allocation2 + $0x20] sm:$0xff]
    %v132 = vld [vmem:[#allocation2 + $0x28] sm:$0xff]
    %v133 = vld [vmem:[#allocation2 + $0x30] sm:$0xff]
    %v134 = vld [vmem:[#allocation2 + $0x38] sm:$0xff]
    %v135 = vld [vmem:[#allocation2 + $0x40] sm:$0xff]
    %v136 = vld [vmem:[#allocation2 + $0x48] sm:$0xff]
    %v137 = vld [vmem:[#allocation2 + $0x50] sm:$0xff]
    %v138 = vld [vmem:[#allocation2 + $0x58] sm:$0xff]
    %v139 = vld [vmem:[#allocation2 + $0x60] sm:$0xff]
    %v140 = vld [vmem:[#allocation2 + $0x68] sm:$0xff]
    %v141 = vld [vmem:[#allocation2 + $0x70] sm:$0xff]
    %v142 = vld [vmem:[#allocation2 + $0x78] sm:$0xff]
    %v143 = vld [vmem:[#allocation2 + $0x80] sm:$0xff]
    %v144 = vld [vmem:[#allocation2 + $0x88] sm:$0xff]
    %v145 = vld [vmem:[#allocation2 + $0x90] sm:$0xff]
    %v146 = vld [vmem:[#allocation2 + $0x98] sm:$0xff]
    %v147 = vld [vmem:[#allocation2 + $0xa0] sm:$0xff]
    %v148 = vld [vmem:[#allocation2 + $0xa8] sm:$0xff]
    %v149 = vld [vmem:[#allocation2 + $0xb0] sm:$0xff]
    %v150 = vld [vmem:[#allocation2 + $0xb8] sm:$0xff]
    %v151 = vld [vmem:[#allocation2 + $0xc0] sm:$0xff]
    %v152 = vld [vmem:[#allocation2 + $0xc8] sm:$0xff]
    %v153 = vld [vmem:[#allocation2 + $0xd0] sm:$0xff]
    %v154 = vld [vmem:[#allocation2 + $0xd8] sm:$0xff]
    %v155 = vld [vmem:[#allocation2 + $0xe0] sm:$0xff]
    %v156 = vld [vmem:[#allocation2 + $0xe8] sm:$0xff]
    %v157 = vld [vmem:[#allocation2 + $0xf0] sm:$0xff]
    %v158 = vld [vmem:[#allocation2 + $0xf8] sm:$0xff]
    %v159 = vld [vmem:[#allocation2 + $0x100] sm:$0xff]
    %v160 = vld [vmem:[#allocation2 + $0x108] sm:$0xff]
    %v161 = vld [vmem:[#allocation2 + $0x110] sm:$0xff]
    %v162 = vld [vmem:[#allocation2 + $0x118] sm:$0xff]
    %v163 = vld [vmem:[#allocation2 + $0x120] sm:$0xff]
    %v164 = vld [vmem:[#allocation2 + $0x128] sm:$0xff]
    %v165 = vld [vmem:[#allocation2 + $0x130] sm:$0xff]
    %v166 = vld [vmem:[#allocation2 + $0x138] sm:$0xff]
    %v167 = vld [vmem:[#allocation2 + $0x140] sm:$0xff]
    %v168 = vld [vmem:[#allocation2 + $0x148] sm:$0xff]
    %v169 = vld [vmem:[#allocation2 + $0x150] sm:$0xff]
    %v170 = vld [vmem:[#allocation2 + $0x158] sm:$0xff]
    %v171 = vld [vmem:[#allocation2 + $0x160] sm:$0xff]
    %v172 = vld [vmem:[#allocation2 + $0x168] sm:$0xff]
    %v173 = vld [vmem:[#allocation2 + $0x170] sm:$0xff]
    %v174 = vld [vmem:[#allocation2 + $0x178] sm:$0xff]
    %v175 = vld [vmem:[#allocation2 + $0x180] sm:$0xff]
    %v176 = vld [vmem:[#allocation2 + $0x188] sm:$0xff]
    %v177 = vld [vmem:[#allocation2 + $0x190] sm:$0xff]
    %v178 = vld [vmem:[#allocation2 + $0x198] sm:$0xff]
    %v179 = vld [vmem:[#allocation2 + $0x1a0] sm:$0xff]
    %v180 = vld [vmem:[#allocation2 + $0x1a8] sm:$0xff]
    %v181 = vld [vmem:[#allocation2 + $0x1b0] sm:$0xff]
    %v182 = vld [vmem:[#allocation2 + $0x1b8] sm:$0xff]
    %v183 = vld [vmem:[#allocation2 + $0x1c0] sm:$0xff]
    %v184 = vld [vmem:[#allocation2 + $0x1c8] sm:$0xff]
    %v185 = vld [vmem:[#allocation2 + $0x1d0] sm:$0xff]
    %v186 = vld [vmem:[#allocation2 + $0x1d8] sm:$0xff]
    %v187 = vld [vmem:[#allocation2 + $0x1e0] sm:$0xff]
    %v188 = vld [vmem:[#allocation2 + $0x1e8] sm:$0xff]
    %v189 = vld [vmem:[#allocation2 + $0x1f0] sm:$0xff]
    %v190 = vld [vmem:[#allocation2 + $0x1f8] sm:$0xff]
    %v191 = vld [vmem:[#allocation3] sm:$0xff]
    %v192 = vld [vmem:[#allocation3 + $0x8] sm:$0xff]
    %v193 = vld [vmem:[#allocation3 + $0x10] sm:$0xff]
    %v194 = vld [vmem:[#allocation3 + $0x18] sm:$0xff]
    %v195 = vld [vmem:[#allocation3 + $0x20] sm:$0xff]
    %v196 = vld [vmem:[#allocation3 + $0x28] sm:$0xff]
    %v197 = vld [vmem:[#allocation3 + $0x30] sm:$0xff]
    %v198 = vld [vmem:[#allocation3 + $0x38] sm:$0xff]
    %v199 = vld [vmem:[#allocation3 + $0x40] sm:$0xff]
    %v200 = vld [vmem:[#allocation3 + $0x48] sm:$0xff]
    %v201 = vld [vmem:[#allocation3 + $0x50] sm:$0xff]
    %v202 = vld [vmem:[#allocation3 + $0x58] sm:$0xff]
    %v203 = vld [vmem:[#allocation3 + $0x60] sm:$0xff]
    %v204 = vld [vmem:[#allocation3 + $0x68] sm:$0xff]
    %v205 = vld [vmem:[#allocation3 + $0x70] sm:$0xff]
    %v206 = vld [vmem:[#allocation3 + $0x78] sm:$0xff]
    %v207 = vld [vmem:[#allocation3 + $0x80] sm:$0xff]
    %v208 = vld [vmem:[#allocation3 + $0x88] sm:$0xff]
    %v209 = vld [vmem:[#allocation3 + $0x90] sm:$0xff]
    %v210 = vld [vmem:[#allocation3 + $0x98] sm:$0xff]
    %v211 = vld [vmem:[#allocation3 + $0xa0] sm:$0xff]
    %v212 = vld [vmem:[#allocation3 + $0xa8] sm:$0xff]
    %v213 = vld [vmem:[#allocation3 + $0xb0] sm:$0xff]
    %v214 = vld [vmem:[#allocation3 + $0xb8] sm:$0xff]
    %v215 = vld [vmem:[#allocation3 + $0xc0] sm:$0xff]
    %v216 = vld [vmem:[#allocation3 + $0xc8] sm:$0xff]
    %v217 = vld [vmem:[#allocation3 + $0xd0] sm:$0xff]
    %v218 = vld [vmem:[#allocation3 + $0xd8] sm:$0xff]
    %v219 = vld [vmem:[#allocation3 + $0xe0] sm:$0xff]
    %v220 = vld [vmem:[#allocation3 + $0xe8] sm:$0xff]
    %v221 = vld [vmem:[#allocation3 + $0xf0] sm:$0xff]
    %v222 = vld [vmem:[#allocation3 + $0xf8] sm:$0xff]
    %v223 = vld [vmem:[#allocation3 + $0x100] sm:$0xff]
    %v224 = vld [vmem:[#allocation3 + $0x108] sm:$0xff]
    %v225 = vld [vmem:[#allocation3 + $0x110] sm:$0xff]
    %v226 = vld [vmem:[#allocation3 + $0x118] sm:$0xff]
    %v227 = vld [vmem:[#allocation3 + $0x120] sm:$0xff]
    %v228 = vld [vmem:[#allocation3 + $0x128] sm:$0xff]
    %v229 = vld [vmem:[#allocation3 + $0x130] sm:$0xff]
    %v230 = vld [vmem:[#allocation3 + $0x138] sm:$0xff]
    %v231 = vld [vmem:[#allocation3 + $0x140] sm:$0xff]
    %v232 = vld [vmem:[#allocation3 + $0x148] sm:$0xff]
    %v233 = vld [vmem:[#allocation3 + $0x150] sm:$0xff]
    %v234 = vld [vmem:[#allocation3 + $0x158] sm:$0xff]
    %v235 = vld [vmem:[#allocation3 + $0x160] sm:$0xff]
    %v236 = vld [vmem:[#allocation3 + $0x168] sm:$0xff]
    %v237 = vld [vmem:[#allocation3 + $0x170] sm:$0xff]
    %v238 = vld [vmem:[#allocation3 + $0x178] sm:$0xff]
    %v239 = vld [vmem:[#allocation3 + $0x180] sm:$0xff]
    %v240 = vld [vmem:[#allocation3 + $0x188] sm:$0xff]
    %v241 = vld [vmem:[#allocation3 + $0x190] sm:$0xff]
    %v242 = vld [vmem:[#allocation3 + $0x198] sm:$0xff]
    %v243 = vld [vmem:[#allocation3 + $0x1a0] sm:$0xff]
    %v244 = vld [vmem:[#allocation3 + $0x1a8] sm:$0xff]
    %v245 = vld [vmem:[#allocation3 + $0x1b0] sm:$0xff]
    %v246 = vld [vmem:[#allocation3 + $0x1b8] sm:$0xff]
    %v247 = vld [vmem:[#allocation3 + $0x1c0] sm:$0xff]
    %v248 = vld [vmem:[#allocation3 + $0x1c8] sm:$0xff]
    %v249 = vld [vmem:[#allocation3 + $0x1d0] sm:$0xff]
    %v250 = vld [vmem:[#allocation3 + $0x1d8] sm:$0xff]
    %v251 = vld [vmem:[#allocation3 + $0x1e0] sm:$0xff]
    %v252 = vld [vmem:[#allocation3 + $0x1e8] sm:$0xff]
    %v253 = vld [vmem:[#allocation3 + $0x1f0] sm:$0xff]
    %v254 = vld [vmem:[#allocation3 + $0x1f8] sm:$0xff]
    %v255 = vld [vmem:[#allocation6] sm:$0xff]
    %v256 = vld [vmem:[#allocation6 + $0x8] sm:$0xff]
    %v257 = vld [vmem:[#allocation6 + $0x10] sm:$0xff]
    %v258 = vld [vmem:[#allocation6 + $0x18] sm:$0xff]
    %v259 = vld [vmem:[#allocation6 + $0x20] sm:$0xff]
    %v260 = vld [vmem:[#allocation6 + $0x28] sm:$0xff]
    %v261 = vld [vmem:[#allocation6 + $0x30] sm:$0xff]
    %v262 = vld [vmem:[#allocation6 + $0x38] sm:$0xff]
    %v263 = vld [vmem:[#allocation6 + $0x40] sm:$0xff]
    %v264 = vld [vmem:[#allocation6 + $0x48] sm:$0xff]
    %v265 = vld [vmem:[#allocation6 + $0x50] sm:$0xff]
    %v266 = vld [vmem:[#allocation6 + $0x58] sm:$0xff]
    %v267 = vld [vmem:[#allocation6 + $0x60] sm:$0xff]
    %v268 = vld [vmem:[#allocation6 + $0x68] sm:$0xff]
    %v269 = vld [vmem:[#allocation6 + $0x70] sm:$0xff]
    %v270 = vld [vmem:[#allocation6 + $0x78] sm:$0xff]
    %271 = vmatprep.subr.mxu0 0.0
    %272 = vmatpush1.msra.mxu0 %v255
    %273 = vmatprep.subr.mxu0 0.0
    %274 = vmatpush1.msra.mxu0 %v256
    %275 = vmatprep.subr.mxu0 0.0
    %276 = vmatpush1.msra.mxu0 %v257
    %277 = vmatprep.subr.mxu0 0.0
    %278 = vmatpush1.msra.mxu0 %v258
    %279 = vmatprep.subr.mxu0 0.0
    %280 = vmatpush1.msra.mxu0 %v259
    %281 = vmatprep.subr.mxu0 0.0
    %282 = vmatpush1.msra.mxu0 %v260
    %283 = vmatprep.subr.mxu0 0.0
    %284 = vmatpush1.msra.mxu0 %v261
    %285 = vmatprep.subr.mxu0 0.0
    %286 = vmatpush1.msra.mxu0 %v262
    %287 = vmatprep.subr.mxu0 0.0
    %288 = vmatpush1.msra.mxu0 %v263
    %289 = vmatprep.subr.mxu0 0.0
    %290 = vmatpush1.msra.mxu0 %v264
    %291 = vmatprep.subr.mxu0 0.0
    %292 = vmatpush1.msra.mxu0 %v265
    %293 = vmatprep.subr.mxu0 0.0
    %294 = vmatpush1.msra.mxu0 %v266
    %295 = vmatprep.subr.mxu0 0.0
    %296 = vmatpush1.msra.mxu0 %v267
    %297 = vmatprep.subr.mxu0 0.0
    %298 = vmatpush1.msra.mxu0 %v268
    %299 = vmatprep.subr.mxu0 0.0
    %300 = vmatpush1.msra.mxu0 %v269
    %301 = vmatprep.subr.mxu0 0.0
    %302 = vmatpush1.msra.mxu0 %v270
    %303 = vmatprep.subr.mxu0 0.0
    %304 = vmatpush1.msra.mxu0 0.0
    %305 = vmatprep.subr.mxu0 0.0
    %306 = vmatpush1.msra.mxu0 0.0
    %307 = vmatprep.subr.mxu0 0.0
    %308 = vmatpush1.msra.mxu0 0.0
    %309 = vmatprep.subr.mxu0 0.0
    %310 = vmatpush1.msra.mxu0 0.0
    %311 = vmatprep.subr.mxu0 0.0
    %312 = vmatpush1.msra.mxu0 0.0
    %313 = vmatprep.subr.mxu0 0.0
    %314 = vmatpush1.msra.mxu0 0.0
    %315 = vmatprep.subr.mxu0 0.0
    %316 = vmatpush1.msra.mxu0 0.0
    %317 = vmatprep.subr.mxu0 0.0
    %318 = vmatpush1.msra.mxu0 0.0
    %319 = vmatprep.subr.mxu0 0.0
    %320 = vmatpush1.msra.mxu0 0.0
    %321 = vmatprep.subr.mxu0 0.0
    %322 = vmatpush1.msra.mxu0 0.0
    %323 = vmatprep.subr.mxu0 0.0
    %324 = vmatpush1.msra.mxu0 0.0
    %325 = vmatprep.subr.mxu0 0.0
    %326 = vmatpush1.msra.mxu0 0.0
    %327 = vmatprep.subr.mxu0 0.0
    %328 = vmatpush1.msra.mxu0 0.0
    %329 = vmatprep.subr.mxu0 0.0
    %330 = vmatpush1.msra.mxu0 0.0
    %331 = vmatprep.subr.mxu0 0.0
    %332 = vmatpush1.msra.mxu0 0.0
    %333 = vmatprep.subr.mxu0 0.0
    %334 = vmatpush1.msra.mxu0 0.0
    %335 = vmatprep.mubr.f32.mxu0 0.0
    %336 = vmatmul.mubr.f32.gmra.mrb[0].mxu0 %v191
    %v337 = vpop.f32.mrb[0].mxu0
    %v338 = vadd.f32 0.0, %v337
    %v339 = vpop.f32.mrb[0].mxu0
    %340 = vmatprep.mubr.f32.mxu0 0.0
    %341 = vmatmul.mubr.f32.gmra.mrb[0].mxu0 %v192
    %v342 = vpop.f32.mrb[0].mxu0
    %v343 = vadd.f32 0.0, %v342
    %v344 = vpop.f32.mrb[0].mxu0
    %345 = vmatprep.mubr.f32.mxu0 0.0
    %346 = vmatmul.mubr.f32.gmra.mrb[0].mxu0 %v193
    %v347 = vpop.f32.mrb[0].mxu0
    %v348 = vadd.f32 0.0, %v347
    %v349 = vpop.f32.mrb[0].mxu0
    %350 = vmatprep.mubr.f32.mxu0 0.0
    %351 = vmatmul.mubr.f32.gmra.mrb[0].mxu0 %v194
    %v352 = vpop.f32.mrb[0].mxu0
    %v353 = vadd.f32 0.0, %v352
    %v354 = vpop.f32.mrb[0].mxu0
    %355 = vmatprep.mubr.f32.mxu0 0.0
    %356 = vmatmul.mubr.f32.gmra.mrb[0].mxu0 %v195
    %v357 = vpop.f32.mrb[0].mxu0
    %v358 = vadd.f32 0.0, %v357
    %v359 = vpop.f32.mrb[0].mxu0
    %360 = vmatprep.mubr.f32.mxu0 0.0
    %361 = vmatmul.mubr.f32.gmra.mrb[0].mxu0 %v196
    %v362 = vpop.f32.mrb[0].mxu0
    %v363 = vadd.f32 0.0, %v362
    %v364 = vpop.f32.mrb[0].mxu0
    %365 = vmatprep.mubr.f32.mxu0 0.0
    %366 = vmatmul.mubr.f32.gmra.mrb[0].mxu0 %v197
    %v367 = vpop.f32.mrb[0].mxu0
    %v368 = vadd.f32 0.0, %v367
    %v369 = vpop.f32.mrb[0].mxu0
    %370 = vmatprep.mubr.f32.mxu0 0.0
    %371 = vmatmul.mubr.f32.gmra.mrb[0].mxu0 %v198
    %v372 = vpop.f32.mrb[0].mxu0
    %v373 = vadd.f32 0.0, %v372
    %v374 = vpop.f32.mrb[0].mxu0
    %375 = vmatprep.mubr.f32.mxu0 0.0
    %376 = vmatmul.mubr.f32.gmra.mrb[0].mxu0 %v199
    %v377 = vpop.f32.mrb[0].mxu0
    %v378 = vadd.f32 0.0, %v377
    %v379 = vpop.f32.mrb[0].mxu0
    %380 = vmatprep.mubr.f32.mxu0 0.0
    %381 = vmatmul.mubr.f32.gmra.mrb[0].mxu0 %v200
    %v382 = vpop.f32.mrb[0].mxu0
    %v383 = vadd.f32 0.0, %v382
    %v384 = vpop.f32.mrb[0].mxu0
    %385 = vmatprep.mubr.f32.mxu0 0.0
    %386 = vmatmul.mubr.f32.gmra.mrb[0].mxu0 %v201
    %v387 = vpop.f32.mrb[0].mxu0
    %v388 = vadd.f32 0.0, %v387
    %v389 = vpop.f32.mrb[0].mxu0
    %390 = vmatprep.mubr.f32.mxu0 0.0
    %391 = vmatmul.mubr.f32.gmra.mrb[0].mxu0 %v202
    %v392 = vpop.f32.mrb[0].mxu0
    %v393 = vadd.f32 0.0, %v392
    %v394 = vpop.f32.mrb[0].mxu0
    %395 = vmatprep.mubr.f32.mxu0 0.0
    %396 = vmatmul.mubr.f32.gmra.mrb[0].mxu0 %v203
    %v397 = vpop.f32.mrb[0].mxu0
    %v398 = vadd.f32 0.0, %v397
    %v399 = vpop.f32.mrb[0].mxu0
    %400 = vmatprep.mubr.f32.mxu0 0.0
    %401 = vmatmul.mubr.f32.gmra.mrb[0].mxu0 %v204
    %v402 = vpop.f32.mrb[0].mxu0
    %v403 = vadd.f32 0.0, %v402
    %v404 = vpop.f32.mrb[0].mxu0
    %405 = vmatprep.mubr.f32.mxu0 0.0
    %406 = vmatmul.mubr.f32.gmra.mrb[0].mxu0 %v205
    %v407 = vpop.f32.mrb[0].mxu0
    %v408 = vadd.f32 0.0, %v407
    %v409 = vpop.f32.mrb[0].mxu0
    %410 = vmatprep.mubr.f32.mxu0 0.0
    %411 = vmatmul.mubr.f32.gmra.mrb[0].mxu0 %v206
    %v412 = vpop.f32.mrb[0].mxu0
    %v413 = vadd.f32 0.0, %v412
    %v414 = vpop.f32.mrb[0].mxu0
    %415 = vmatprep.mubr.f32.mxu0 0.0
    %416 = vmatmul.mubr.f32.gmra.mrb[0].mxu0 %v207
    %v417 = vpop.f32.mrb[0].mxu0
    %v418 = vadd.f32 0.0, %v417
    %v419 = vpop.f32.mrb[0].mxu0
    %420 = vmatprep.mubr.f32.mxu0 0.0
    %421 = vmatmul.mubr.f32.gmra.mrb[0].mxu0 %v208
    %v422 = vpop.f32.mrb[0].mxu0
    %v423 = vadd.f32 0.0, %v422
    %v424 = vpop.f32.mrb[0].mxu0
    %425 = vmatprep.mubr.f32.mxu0 0.0
    %426 = vmatmul.mubr.f32.gmra.mrb[0].mxu0 %v209
    %v427 = vpop.f32.mrb[0].mxu0
    %v428 = vadd.f32 0.0, %v427
    %v429 = vpop.f32.mrb[0].mxu0
    %430 = vmatprep.mubr.f32.mxu0 0.0
    %431 = vmatmul.mubr.f32.gmra.mrb[0].mxu0 %v210
    %v432 = vpop.f32.mrb[0].mxu0
    %v433 = vadd.f32 0.0, %v432
    %v434 = vpop.f32.mrb[0].mxu0
    %435 = vmatprep.mubr.f32.mxu0 0.0
    %436 = vmatmul.mubr.f32.gmra.mrb[0].mxu0 %v211
    %v437 = vpop.f32.mrb[0].mxu0
    %v438 = vadd.f32 0.0, %v437
    %v439 = vpop.f32.mrb[0].mxu0
    %440 = vmatprep.mubr.f32.mxu0 0.0
    %441 = vmatmul.mubr.f32.gmra.mrb[0].mxu0 %v212
    %v442 = vpop.f32.mrb[0].mxu0
    %v443 = vadd.f32 0.0, %v442
    %v444 = vpop.f32.mrb[0].mxu0
    %445 = vmatprep.mubr.f32.mxu0 0.0
    %446 = vmatmul.mubr.f32.gmra.mrb[0].mxu0 %v213
    %v447 = vpop.f32.mrb[0].mxu0
    %v448 = vadd.f32 0.0, %v447
    %v449 = vpop.f32.mrb[0].mxu0
    %450 = vmatprep.mubr.f32.mxu0 0.0
    %451 = vmatmul.mubr.f32.gmra.mrb[0].mxu0 %v214
    %v452 = vpop.f32.mrb[0].mxu0
    %v453 = vadd.f32 0.0, %v452
    %v454 = vpop.f32.mrb[0].mxu0
    %455 = vmatprep.mubr.f32.mxu0 0.0
    %456 = vmatmul.mubr.f32.gmra.mrb[0].mxu0 %v215
    %v457 = vpop.f32.mrb[0].mxu0
    %v458 = vadd.f32 0.0, %v457
    %v459 = vpop.f32.mrb[0].mxu0
    %460 = vmatprep.mubr.f32.mxu0 0.0
    %461 = vmatmul.mubr.f32.gmra.mrb[0].mxu0 %v216
    %v462 = vpop.f32.mrb[0].mxu0
    %v463 = vadd.f32 0.0, %v462
    %v464 = vpop.f32.mrb[0].mxu0
    %465 = vmatprep.mubr.f32.mxu0 0.0
    %466 = vmatmul.mubr.f32.gmra.mrb[0].mxu0 %v217
    %v467 = vpop.f32.mrb[0].mxu0
    %v468 = vadd.f32 0.0, %v467
    %v469 = vpop.f32.mrb[0].mxu0
    %470 = vmatprep.mubr.f32.mxu0 0.0
    %471 = vmatmul.mubr.f32.gmra.mrb[0].mxu0 %v218
    %v472 = vpop.f32.mrb[0].mxu0
    %v473 = vadd.f32 0.0, %v472
    %v474 = vpop.f32.mrb[0].mxu0
    %475 = vmatprep.mubr.f32.mxu0 0.0
    %476 = vmatmul.mubr.f32.gmra.mrb[0].mxu0 %v219
    %v477 = vpop.f32.mrb[0].mxu0
    %v478 = vadd.f32 0.0, %v477
    %v479 = vpop.f32.mrb[0].mxu0
    %480 = vmatprep.mubr.f32.mxu0 0.0
    %481 = vmatmul.mubr.f32.gmra.mrb[0].mxu0 %v220
    %v482 = vpop.f32.mrb[0].mxu0
    %v483 = vadd.f32 0.0, %v482
    %v484 = vpop.f32.mrb[0].mxu0
    %485 = vmatprep.mubr.f32.mxu0 0.0
    %486 = vmatmul.mubr.f32.gmra.mrb[0].mxu0 %v221
    %v487 = vpop.f32.mrb[0].mxu0
    %v488 = vadd.f32 0.0, %v487
    %v489 = vpop.f32.mrb[0].mxu0
    %490 = vmatprep.mubr.f32.mxu0 0.0
    %491 = vmatmul.mubr.f32.gmra.mrb[0].mxu0 %v222
    %v492 = vpop.f32.mrb[0].mxu0
    %v493 = vadd.f32 0.0, %v492
    %v494 = vpop.f32.mrb[0].mxu0
    %495 = vmatprep.mubr.f32.mxu0 0.0
    %496 = vmatmul.mubr.f32.gmra.mrb[0].mxu0 %v223
    %v497 = vpop.f32.mrb[0].mxu0
    %v498 = vadd.f32 0.0, %v497
    %v499 = vpop.f32.mrb[0].mxu0
    %500 = vmatprep.mubr.f32.mxu0 0.0
    %501 = vmatmul.mubr.f32.gmra.mrb[0].mxu0 %v224
    %v502 = vpop.f32.mrb[0].mxu0
    %v503 = vadd.f32 0.0, %v502
    %v504 = vpop.f32.mrb[0].mxu0
    %505 = vmatprep.mubr.f32.mxu0 0.0
    %506 = vmatmul.mubr.f32.gmra.mrb[0].mxu0 %v225
    %v507 = vpop.f32.mrb[0].mxu0
    %v508 = vadd.f32 0.0, %v507
    %v509 = vpop.f32.mrb[0].mxu0
    %510 = vmatprep.mubr.f32.mxu0 0.0
    %511 = vmatmul.mubr.f32.gmra.mrb[0].mxu0 %v226
    %v512 = vpop.f32.mrb[0].mxu0
    %v513 = vadd.f32 0.0, %v512
    %v514 = vpop.f32.mrb[0].mxu0
    %515 = vmatprep.mubr.f32.mxu0 0.0
    %516 = vmatmul.mubr.f32.gmra.mrb[0].mxu0 %v227
    %v517 = vpop.f32.mrb[0].mxu0
    %v518 = vadd.f32 0.0, %v517
    %v519 = vpop.f32.mrb[0].mxu0
    %520 = vmatprep.mubr.f32.mxu0 0.0
    %521 = vmatmul.mubr.f32.gmra.mrb[0].mxu0 %v228
    %v522 = vpop.f32.mrb[0].mxu0
    %v523 = vadd.f32 0.0, %v522
    %v524 = vpop.f32.mrb[0].mxu0
    %525 = vmatprep.mubr.f32.mxu0 0.0
    %526 = vmatmul.mubr.f32.gmra.mrb[0].mxu0 %v229
    %v527 = vpop.f32.mrb[0].mxu0
    %v528 = vadd.f32 0.0, %v527
    %v529 = vpop.f32.mrb[0].mxu0
    %530 = vmatprep.mubr.f32.mxu0 0.0
    %531 = vmatmul.mubr.f32.gmra.mrb[0].mxu0 %v230
    %v532 = vpop.f32.mrb[0].mxu0
    %v533 = vadd.f32 0.0, %v532
    %v534 = vpop.f32.mrb[0].mxu0
    %535 = vmatprep.mubr.f32.mxu0 0.0
    %536 = vmatmul.mubr.f32.gmra.mrb[0].mxu0 %v231
    %v537 = vpop.f32.mrb[0].mxu0
    %v538 = vadd.f32 0.0, %v537
    %v539 = vpop.f32.mrb[0].mxu0
    %540 = vmatprep.mubr.f32.mxu0 0.0
    %541 = vmatmul.mubr.f32.gmra.mrb[0].mxu0 %v232
    %v542 = vpop.f32.mrb[0].mxu0
    %v543 = vadd.f32 0.0, %v542
    %v544 = vpop.f32.mrb[0].mxu0
    %545 = vmatprep.mubr.f32.mxu0 0.0
    %546 = vmatmul.mubr.f32.gmra.mrb[0].mxu0 %v233
    %v547 = vpop.f32.mrb[0].mxu0
    %v548 = vadd.f32 0.0, %v547
    %v549 = vpop.f32.mrb[0].mxu0
    %550 = vmatprep.mubr.f32.mxu0 0.0
    %551 = vmatmul.mubr.f32.gmra.mrb[0].mxu0 %v234
    %v552 = vpop.f32.mrb[0].mxu0
    %v553 = vadd.f32 0.0, %v552
    %v554 = vpop.f32.mrb[0].mxu0
    %555 = vmatprep.mubr.f32.mxu0 0.0
    %556 = vmatmul.mubr.f32.gmra.mrb[0].mxu0 %v235
    %v557 = vpop.f32.mrb[0].mxu0
    %v558 = vadd.f32 0.0, %v557
    %v559 = vpop.f32.mrb[0].mxu0
    %560 = vmatprep.mubr.f32.mxu0 0.0
    %561 = vmatmul.mubr.f32.gmra.mrb[0].mxu0 %v236
    %v562 = vpop.f32.mrb[0].mxu0
    %v563 = vadd.f32 0.0, %v562
    %v564 = vpop.f32.mrb[0].mxu0
    %565 = vmatprep.mubr.f32.mxu0 0.0
    %566 = vmatmul.mubr.f32.gmra.mrb[0].mxu0 %v237
    %v567 = vpop.f32.mrb[0].mxu0
    %v568 = vadd.f32 0.0, %v567
    %v569 = vpop.f32.mrb[0].mxu0
    %570 = vmatprep.mubr.f32.mxu0 0.0
    %571 = vmatmul.mubr.f32.gmra.mrb[0].mxu0 %v238
    %v572 = vpop.f32.mrb[0].mxu0
    %v573 = vadd.f32 0.0, %v572
    %v574 = vpop.f32.mrb[0].mxu0
    %575 = vmatprep.mubr.f32.mxu0 0.0
    %576 = vmatmul.mubr.f32.gmra.mrb[0].mxu0 %v239
    %v577 = vpop.f32.mrb[0].mxu0
    %v578 = vadd.f32 0.0, %v577
    %v579 = vpop.f32.mrb[0].mxu0
    %580 = vmatprep.mubr.f32.mxu0 0.0
    %581 = vmatmul.mubr.f32.gmra.mrb[0].mxu0 %v240
    %v582 = vpop.f32.mrb[0].mxu0
    %v583 = vadd.f32 0.0, %v582
    %v584 = vpop.f32.mrb[0].mxu0
    %585 = vmatprep.mubr.f32.mxu0 0.0
    %586 = vmatmul.mubr.f32.gmra.mrb[0].mxu0 %v241
    %v587 = vpop.f32.mrb[0].mxu0
    %v588 = vadd.f32 0.0, %v587
    %v589 = vpop.f32.mrb[0].mxu0
    %590 = vmatprep.mubr.f32.mxu0 0.0
    %591 = vmatmul.mubr.f32.gmra.mrb[0].mxu0 %v242
    %v592 = vpop.f32.mrb[0].mxu0
    %v593 = vadd.f32 0.0, %v592
    %v594 = vpop.f32.mrb[0].mxu0
    %595 = vmatprep.mubr.f32.mxu0 0.0
    %596 = vmatmul.mubr.f32.gmra.mrb[0].mxu0 %v243
    %v597 = vpop.f32.mrb[0].mxu0
    %v598 = vadd.f32 0.0, %v597
    %v599 = vpop.f32.mrb[0].mxu0
    %600 = vmatprep.mubr.f32.mxu0 0.0
    %601 = vmatmul.mubr.f32.gmra.mrb[0].mxu0 %v244
    %v602 = vpop.f32.mrb[0].mxu0
    %v603 = vadd.f32 0.0, %v602
    %v604 = vpop.f32.mrb[0].mxu0
    %605 = vmatprep.mubr.f32.mxu0 0.0
    %606 = vmatmul.mubr.f32.gmra.mrb[0].mxu0 %v245
    %v607 = vpop.f32.mrb[0].mxu0
    %v608 = vadd.f32 0.0, %v607
    %v609 = vpop.f32.mrb[0].mxu0
    %610 = vmatprep.mubr.f32.mxu0 0.0
    %611 = vmatmul.mubr.f32.gmra.mrb[0].mxu0 %v246
    %v612 = vpop.f32.mrb[0].mxu0
    %v613 = vadd.f32 0.0, %v612
    %v614 = vpop.f32.mrb[0].mxu0
    %615 = vmatprep.mubr.f32.mxu0 0.0
    %616 = vmatmul.mubr.f32.gmra.mrb[0].mxu0 %v247
    %v617 = vpop.f32.mrb[0].mxu0
    %v618 = vadd.f32 0.0, %v617
    %v619 = vpop.f32.mrb[0].mxu0
    %620 = vmatprep.mubr.f32.mxu0 0.0
    %621 = vmatmul.mubr.f32.gmra.mrb[0].mxu0 %v248
    %v622 = vpop.f32.mrb[0].mxu0
    %v623 = vadd.f32 0.0, %v622
    %v624 = vpop.f32.mrb[0].mxu0
    %625 = vmatprep.mubr.f32.mxu0 0.0
    %626 = vmatmul.mubr.f32.gmra.mrb[0].mxu0 %v249
    %v627 = vpop.f32.mrb[0].mxu0
    %v628 = vadd.f32 0.0, %v627
    %v629 = vpop.f32.mrb[0].mxu0
    %630 = vmatprep.mubr.f32.mxu0 0.0
    %631 = vmatmul.mubr.f32.gmra.mrb[0].mxu0 %v250
    %v632 = vpop.f32.mrb[0].mxu0
    %v633 = vadd.f32 0.0, %v632
    %v634 = vpop.f32.mrb[0].mxu0
    %635 = vmatprep.mubr.f32.mxu0 0.0
    %636 = vmatmul.mubr.f32.gmra.mrb[0].mxu0 %v251
    %v637 = vpop.f32.mrb[0].mxu0
    %v638 = vadd.f32 0.0, %v637
    %v639 = vpop.f32.mrb[0].mxu0
    %640 = vmatprep.mubr.f32.mxu0 0.0
    %641 = vmatmul.mubr.f32.gmra.mrb[0].mxu0 %v252
    %v642 = vpop.f32.mrb[0].mxu0
    %v643 = vadd.f32 0.0, %v642
    %v644 = vpop.f32.mrb[0].mxu0
    %645 = vmatprep.mubr.f32.mxu0 0.0
    %646 = vmatmul.mubr.f32.gmra.mrb[0].mxu0 %v253
    %v647 = vpop.f32.mrb[0].mxu0
    %v648 = vadd.f32 0.0, %v647
    %v649 = vpop.f32.mrb[0].mxu0
    %650 = vmatprep.mubr.f32.mxu0 0.0
    %651 = vmatmul.mubr.f32.gmra.mrb[0].mxu0 %v254
    %v652 = vpop.f32.mrb[0].mxu0
    %v653 = vadd.f32 0.0, %v652
    %v654 = vpop.f32.mrb[0].mxu0
    %655 = vdwg.mxu0
    %v656 = vadd.f32 %v127, %v338
    %v657 = vadd.f32 %v128, %v343
    %v658 = vadd.f32 %v129, %v348
    %v659 = vadd.f32 %v130, %v353
    %v660 = vadd.f32 %v131, %v358
    %v661 = vadd.f32 %v132, %v363
    %v662 = vadd.f32 %v133, %v368
    %v663 = vadd.f32 %v134, %v373
    %v664 = vadd.f32 %v135, %v378
    %v665 = vadd.f32 %v136, %v383
    %v666 = vadd.f32 %v137, %v388
    %v667 = vadd.f32 %v138, %v393
    %v668 = vadd.f32 %v139, %v398
    %v669 = vadd.f32 %v140, %v403
    %v670 = vadd.f32 %v141, %v408
    %v671 = vadd.f32 %v142, %v413
    %v672 = vadd.f32 %v143, %v418
    %v673 = vadd.f32 %v144, %v423
    %v674 = vadd.f32 %v145, %v428
    %v675 = vadd.f32 %v146, %v433
    %v676 = vadd.f32 %v147, %v438
    %v677 = vadd.f32 %v148, %v443
    %v678 = vadd.f32 %v149, %v448
    %v679 = vadd.f32 %v150, %v453
    %v680 = vadd.f32 %v151, %v458
    %v681 = vadd.f32 %v152, %v463
    %v682 = vadd.f32 %v153, %v468
    %v683 = vadd.f32 %v154, %v473
    %v684 = vadd.f32 %v155, %v478
    %v685 = vadd.f32 %v156, %v483
    %v686 = vadd.f32 %v157, %v488
    %v687 = vadd.f32 %v158, %v493
    %v688 = vadd.f32 %v159, %v498
    %v689 = vadd.f32 %v160, %v503
    %v690 = vadd.f32 %v161, %v508
    %v691 = vadd.f32 %v162, %v513
    %v692 = vadd.f32 %v163, %v518
    %v693 = vadd.f32 %v164, %v523
    %v694 = vadd.f32 %v165, %v528
    %v695 = vadd.f32 %v166, %v533
    %v696 = vadd.f32 %v167, %v538
    %v697 = vadd.f32 %v168, %v543
    %v698 = vadd.f32 %v169, %v548
    %v699 = vadd.f32 %v170, %v553
    %v700 = vadd.f32 %v171, %v558
    %v701 = vadd.f32 %v172, %v563
    %v702 = vadd.f32 %v173, %v568
    %v703 = vadd.f32 %v174, %v573
    %v704 = vadd.f32 %v175, %v578
    %v705 = vadd.f32 %v176, %v583
    %v706 = vadd.f32 %v177, %v588
    %v707 = vadd.f32 %v178, %v593
    %v708 = vadd.f32 %v179, %v598
    %v709 = vadd.f32 %v180, %v603
    %v710 = vadd.f32 %v181, %v608
    %v711 = vadd.f32 %v182, %v613
    %v712 = vadd.f32 %v183, %v618
    %v713 = vadd.f32 %v184, %v623
    %v714 = vadd.f32 %v185, %v628
    %v715 = vadd.f32 %v186, %v633
    %v716 = vadd.f32 %v187, %v638
    %v717 = vadd.f32 %v188, %v643
    %v718 = vadd.f32 %v189, %v648
    %v719 = vadd.f32 %v190, %v653
    %720 = vst [vmem:[#allocation2] sm:$0xff] %v656
    %721 = vst [vmem:[#allocation2 + $0x8] sm:$0xff] %v657
    %722 = vst [vmem:[#allocation2 + $0x10] sm:$0xff] %v658
    %723 = vst [vmem:[#allocation2 + $0x18] sm:$0xff] %v659
    %724 = vst [vmem:[#allocation2 + $0x20] sm:$0xff] %v660
    %725 = vst [vmem:[#allocation2 + $0x28] sm:$0xff] %v661
    %726 = vst [vmem:[#allocation2 + $0x30] sm:$0xff] %v662
    %727 = vst [vmem:[#allocation2 + $0x38] sm:$0xff] %v663
    %728 = vst [vmem:[#allocation2 + $0x40] sm:$0xff] %v664
    %729 = vst [vmem:[#allocation2 + $0x48] sm:$0xff] %v665
    %730 = vst [vmem:[#allocation2 + $0x50] sm:$0xff] %v666
    %731 = vst [vmem:[#allocation2 + $0x58] sm:$0xff] %v667
    %732 = vst [vmem:[#allocation2 + $0x60] sm:$0xff] %v668
    %733 = vst [vmem:[#allocation2 + $0x68] sm:$0xff] %v669
    %734 = vst [vmem:[#allocation2 + $0x70] sm:$0xff] %v670
    %735 = vst [vmem:[#allocation2 + $0x78] sm:$0xff] %v671
    %736 = vst [vmem:[#allocation2 + $0x80] sm:$0xff] %v672
    %737 = vst [vmem:[#allocation2 + $0x88] sm:$0xff] %v673
    %738 = vst [vmem:[#allocation2 + $0x90] sm:$0xff] %v674
    %739 = vst [vmem:[#allocation2 + $0x98] sm:$0xff] %v675
    %740 = vst [vmem:[#allocation2 + $0xa0] sm:$0xff] %v676
    %741 = vst [vmem:[#allocation2 + $0xa8] sm:$0xff] %v677
    %742 = vst [vmem:[#allocation2 + $0xb0] sm:$0xff] %v678
    %743 = vst [vmem:[#allocation2 + $0xb8] sm:$0xff] %v679
    %744 = vst [vmem:[#allocation2 + $0xc0] sm:$0xff] %v680
    %745 = vst [vmem:[#allocation2 + $0xc8] sm:$0xff] %v681
    %746 = vst [vmem:[#allocation2 + $0xd0] sm:$0xff] %v682
    %747 = vst [vmem:[#allocation2 + $0xd8] sm:$0xff] %v683
    %748 = vst [vmem:[#allocation2 + $0xe0] sm:$0xff] %v684
    %749 = vst [vmem:[#allocation2 + $0xe8] sm:$0xff] %v685
    %750 = vst [vmem:[#allocation2 + $0xf0] sm:$0xff] %v686
    %751 = vst [vmem:[#allocation2 + $0xf8] sm:$0xff] %v687
    %752 = vst [vmem:[#allocation2 + $0x100] sm:$0xff] %v688
    %753 = vst [vmem:[#allocation2 + $0x108] sm:$0xff] %v689
    %754 = vst [vmem:[#allocation2 + $0x110] sm:$0xff] %v690
    %755 = vst [vmem:[#allocation2 + $0x118] sm:$0xff] %v691
    %756 = vst [vmem:[#allocation2 + $0x120] sm:$0xff] %v692
    %757 = vst [vmem:[#allocation2 + $0x128] sm:$0xff] %v693
    %758 = vst [vmem:[#allocation2 + $0x130] sm:$0xff] %v694
    %759 = vst [vmem:[#allocation2 + $0x138] sm:$0xff] %v695
    %760 = vst [vmem:[#allocation2 + $0x140] sm:$0xff] %v696
    %761 = vst [vmem:[#allocation2 + $0x148] sm:$0xff] %v697
    %762 = vst [vmem:[#allocation2 + $0x150] sm:$0xff] %v698
    %763 = vst [vmem:[#allocation2 + $0x158] sm:$0xff] %v699
    %764 = vst [vmem:[#allocation2 + $0x160] sm:$0xff] %v700
    %765 = vst [vmem:[#allocation2 + $0x168] sm:$0xff] %v701
    %766 = vst [vmem:[#allocation2 + $0x170] sm:$0xff] %v702
    %767 = vst [vmem:[#allocation2 + $0x178] sm:$0xff] %v703
    %768 = vst [vmem:[#allocation2 + $0x180] sm:$0xff] %v704
    %769 = vst [vmem:[#allocation2 + $0x188] sm:$0xff] %v705
    %770 = vst [vmem:[#allocation2 + $0x190] sm:$0xff] %v706
    %771 = vst [vmem:[#allocation2 + $0x198] sm:$0xff] %v707
    %772 = vst [vmem:[#allocation2 + $0x1a0] sm:$0xff] %v708
    %773 = vst [vmem:[#allocation2 + $0x1a8] sm:$0xff] %v709
    %774 = vst [vmem:[#allocation2 + $0x1b0] sm:$0xff] %v710
    %775 = vst [vmem:[#allocation2 + $0x1b8] sm:$0xff] %v711
    %776 = vst [vmem:[#allocation2 + $0x1c0] sm:$0xff] %v712
    %777 = vst [vmem:[#allocation2 + $0x1c8] sm:$0xff] %v713
    %778 = vst [vmem:[#allocation2 + $0x1d0] sm:$0xff] %v714
    %779 = vst [vmem:[#allocation2 + $0x1d8] sm:$0xff] %v715
    %780 = vst [vmem:[#allocation2 + $0x1e0] sm:$0xff] %v716
    %781 = vst [vmem:[#allocation2 + $0x1e8] sm:$0xff] %v717
    %782 = vst [vmem:[#allocation2 + $0x1f0] sm:$0xff] %v718
    %783 = vst [vmem:[#allocation2 + $0x1f8] sm:$0xff] %v719
    // Predicated region
    $region34: #{tpu_custom_call.1} parent=1 // pred_check
      %p784 = pneg %p59
    $region35: #{tpu_custom_call.1} parent=1 // pred_check_branch
      %786 = sbr.rel (%p784) target = $region37
    $region36: #{tpu_custom_call.1} parent=1 // pred_region
      %v787 = vld [vmem:[#allocation2] sm:$0xff]
      %v788 = vld [vmem:[#allocation2 + $0x8] sm:$0xff]
      %v789 = vld [vmem:[#allocation2 + $0x10] sm:$0xff]
      %v790 = vld [vmem:[#allocation2 + $0x18] sm:$0xff]
      %v791 = vld [vmem:[#allocation2 + $0x20] sm:$0xff]
      %v792 = vld [vmem:[#allocation2 + $0x28] sm:$0xff]
      %v793 = vld [vmem:[#allocation2 + $0x30] sm:$0xff]
      %v794 = vld [vmem:[#allocation2 + $0x38] sm:$0xff]
      %v795 = vld [vmem:[#allocation2 + $0x40] sm:$0xff]
      %v796 = vld [vmem:[#allocation2 + $0x48] sm:$0xff]
      %v797 = vld [vmem:[#allocation2 + $0x50] sm:$0xff]
      %v798 = vld [vmem:[#allocation2 + $0x58] sm:$0xff]
      %v799 = vld [vmem:[#allocation2 + $0x60] sm:$0xff]
      %v800 = vld [vmem:[#allocation2 + $0x68] sm:$0xff]
      %v801 = vld [vmem:[#allocation2 + $0x70] sm:$0xff]
      %v802 = vld [vmem:[#allocation2 + $0x78] sm:$0xff]
      %v803 = vld [vmem:[#allocation2 + $0x80] sm:$0xff]
      %v804 = vld [vmem:[#allocation2 + $0x88] sm:$0xff]
      %v805 = vld [vmem:[#allocation2 + $0x90] sm:$0xff]
      %v806 = vld [vmem:[#allocation2 + $0x98] sm:$0xff]
      %v807 = vld [vmem:[#allocation2 + $0xa0] sm:$0xff]
      %v808 = vld [vmem:[#allocation2 + $0xa8] sm:$0xff]
      %v809 = vld [vmem:[#allocation2 + $0xb0] sm:$0xff]
      %v810 = vld [vmem:[#allocation2 + $0xb8] sm:$0xff]
      %v811 = vld [vmem:[#allocation2 + $0xc0] sm:$0xff]
      %v812 = vld [vmem:[#allocation2 + $0xc8] sm:$0xff]
      %v813 = vld [vmem:[#allocation2 + $0xd0] sm:$0xff]
      %v814 = vld [vmem:[#allocation2 + $0xd8] sm:$0xff]
      %v815 = vld [vmem:[#allocation2 + $0xe0] sm:$0xff]
      %v816 = vld [vmem:[#allocation2 + $0xe8] sm:$0xff]
      %v817 = vld [vmem:[#allocation2 + $0xf0] sm:$0xff]
      %v818 = vld [vmem:[#allocation2 + $0xf8] sm:$0xff]
      %v819 = vld [vmem:[#allocation2 + $0x100] sm:$0xff]
      %v820 = vld [vmem:[#allocation2 + $0x108] sm:$0xff]
      %v821 = vld [vmem:[#allocation2 + $0x110] sm:$0xff]
      %v822 = vld [vmem:[#allocation2 + $0x118] sm:$0xff]
      %v823 = vld [vmem:[#allocation2 + $0x120] sm:$0xff]
      %v824 = vld [vmem:[#allocation2 + $0x128] sm:$0xff]
      %v825 = vld [vmem:[#allocation2 + $0x130] sm:$0xff]
      %v826 = vld [vmem:[#allocation2 + $0x138] sm:$0xff]
      %v827 = vld [vmem:[#allocation2 + $0x140] sm:$0xff]
      %v828 = vld [vmem:[#allocation2 + $0x148] sm:$0xff]
      %v829 = vld [vmem:[#allocation2 + $0x150] sm:$0xff]
      %v830 = vld [vmem:[#allocation2 + $0x158] sm:$0xff]
      %v831 = vld [vmem:[#allocation2 + $0x160] sm:$0xff]
      %v832 = vld [vmem:[#allocation2 + $0x168] sm:$0xff]
      %v833 = vld [vmem:[#allocation2 + $0x170] sm:$0xff]
      %v834 = vld [vmem:[#allocation2 + $0x178] sm:$0xff]
      %v835 = vld [vmem:[#allocation2 + $0x180] sm:$0xff]
      %v836 = vld [vmem:[#allocation2 + $0x188] sm:$0xff]
      %v837 = vld [vmem:[#allocation2 + $0x190] sm:$0xff]
      %v838 = vld [vmem:[#allocation2 + $0x198] sm:$0xff]
      %v839 = vld [vmem:[#allocation2 + $0x1a0] sm:$0xff]
      %v840 = vld [vmem:[#allocation2 + $0x1a8] sm:$0xff]
      %v841 = vld [vmem:[#allocation2 + $0x1b0] sm:$0xff]
      %v842 = vld [vmem:[#allocation2 + $0x1b8] sm:$0xff]
      %v843 = vld [vmem:[#allocation2 + $0x1c0] sm:$0xff]
      %v844 = vld [vmem:[#allocation2 + $0x1c8] sm:$0xff]
      %v845 = vld [vmem:[#allocation2 + $0x1d0] sm:$0xff]
      %v846 = vld [vmem:[#allocation2 + $0x1d8] sm:$0xff]
      %v847 = vld [vmem:[#allocation2 + $0x1e0] sm:$0xff]
      %v848 = vld [vmem:[#allocation2 + $0x1e8] sm:$0xff]
      %v849 = vld [vmem:[#allocation2 + $0x1f0] sm:$0xff]
      %v850 = vld [vmem:[#allocation2 + $0x1f8] sm:$0xff]
      %v851 = vld [vmem:[%s2] sm:$0x1]
      %v853 = vlaneseq
      %v854 = vshrl.u32 %v853, 7
      %v855 = vsub.s32 0, %v854
      %v856 = vrot.slane %v851, %v855
      %v858 = vadd.f32 %v787, %v856
      %v859 = vadd.f32 %v788, %v856
      %v860 = vadd.f32 %v789, %v856
      %v861 = vadd.f32 %v790, %v856
      %v862 = vadd.f32 %v791, %v856
      %v863 = vadd.f32 %v792, %v856
      %v864 = vadd.f32 %v793, %v856
      %v865 = vadd.f32 %v794, %v856
      %v866 = vadd.f32 %v795, %v856
      %v867 = vadd.f32 %v796, %v856
      %v868 = vadd.f32 %v797, %v856
      %v869 = vadd.f32 %v798, %v856
      %v870 = vadd.f32 %v799, %v856
      %v871 = vadd.f32 %v800, %v856
      %v872 = vadd.f32 %v801, %v856
      %v873 = vadd.f32 %v802, %v856
      %v874 = vadd.f32 %v803, %v856
      %v875 = vadd.f32 %v804, %v856
      %v876 = vadd.f32 %v805, %v856
      %v877 = vadd.f32 %v806, %v856
      %v878 = vadd.f32 %v807, %v856
      %v879 = vadd.f32 %v808, %v856
      %v880 = vadd.f32 %v809, %v856
      %v881 = vadd.f32 %v810, %v856
      %v882 = vadd.f32 %v811, %v856
      %v883 = vadd.f32 %v812, %v856
      %v884 = vadd.f32 %v813, %v856
      %v885 = vadd.f32 %v814, %v856
      %v886 = vadd.f32 %v815, %v856
      %v887 = vadd.f32 %v816, %v856
      %v888 = vadd.f32 %v817, %v856
      %v889 = vadd.f32 %v818, %v856
      %v890 = vadd.f32 %v819, %v856
      %v891 = vadd.f32 %v820, %v856
      %v892 = vadd.f32 %v821, %v856
      %v893 = vadd.f32 %v822, %v856
      %v894 = vadd.f32 %v823, %v856
      %v895 = vadd.f32 %v824, %v856
      %v896 = vadd.f32 %v825, %v856
      %v897 = vadd.f32 %v826, %v856
      %v898 = vadd.f32 %v827, %v856
      %v899 = vadd.f32 %v828, %v856
      %v900 = vadd.f32 %v829, %v856
      %v901 = vadd.f32 %v830, %v856
      %v902 = vadd.f32 %v831, %v856
      %v903 = vadd.f32 %v832, %v856
      %v904 = vadd.f32 %v833, %v856
      %v905 = vadd.f32 %v834, %v856
      %v906 = vadd.f32 %v835, %v856
      %v907 = vadd.f32 %v836, %v856
      %v908 = vadd.f32 %v837, %v856
      %v909 = vadd.f32 %v838, %v856
      %v910 = vadd.f32 %v839, %v856
      %v911 = vadd.f32 %v840, %v856
      %v912 = vadd.f32 %v841, %v856
      %v913 = vadd.f32 %v842, %v856
      %v914 = vadd.f32 %v843, %v856
      %v915 = vadd.f32 %v844, %v856
      %v916 = vadd.f32 %v845, %v856
      %v917 = vadd.f32 %v846, %v856
      %v918 = vadd.f32 %v847, %v856
      %v919 = vadd.f32 %v848, %v856
      %v920 = vadd.f32 %v849, %v856
      %v921 = vadd.f32 %v850, %v856
      %v922 = vld [vmem:[#allocation8] sm:$0xff]
      %v923 = vld [vmem:[#allocation8 + $0x8] sm:$0xff]
      %v924 = vld [vmem:[#allocation8 + $0x10] sm:$0xff]
      %v925 = vld [vmem:[#allocation8 + $0x18] sm:$0xff]
      %v926 = vld [vmem:[#allocation8 + $0x20] sm:$0xff]
      %v927 = vld [vmem:[#allocation8 + $0x28] sm:$0xff]
      %v928 = vld [vmem:[#allocation8 + $0x30] sm:$0xff]
      %v929 = vld [vmem:[#allocation8 + $0x38] sm:$0xff]
      %v930 = vld [vmem:[#allocation8 + $0x40] sm:$0xff]
      %v931 = vld [vmem:[#allocation8 + $0x48] sm:$0xff]
      %v932 = vld [vmem:[#allocation8 + $0x50] sm:$0xff]
      %v933 = vld [vmem:[#allocation8 + $0x58] sm:$0xff]
      %v934 = vld [vmem:[#allocation8 + $0x60] sm:$0xff]
      %v935 = vld [vmem:[#allocation8 + $0x68] sm:$0xff]
      %v936 = vld [vmem:[#allocation8 + $0x70] sm:$0xff]
      %v937 = vld [vmem:[#allocation8 + $0x78] sm:$0xff]
      %v938 = vld [vmem:[#allocation8 + $0x80] sm:$0xff]
      %v939 = vld [vmem:[#allocation8 + $0x88] sm:$0xff]
      %v940 = vld [vmem:[#allocation8 + $0x90] sm:$0xff]
      %v941 = vld [vmem:[#allocation8 + $0x98] sm:$0xff]
      %v942 = vld [vmem:[#allocation8 + $0xa0] sm:$0xff]
      %v943 = vld [vmem:[#allocation8 + $0xa8] sm:$0xff]
      %v944 = vld [vmem:[#allocation8 + $0xb0] sm:$0xff]
      %v945 = vld [vmem:[#allocation8 + $0xb8] sm:$0xff]
      %v946 = vld [vmem:[#allocation8 + $0xc0] sm:$0xff]
      %v947 = vld [vmem:[#allocation8 + $0xc8] sm:$0xff]
      %v948 = vld [vmem:[#allocation8 + $0xd0] sm:$0xff]
      %v949 = vld [vmem:[#allocation8 + $0xd8] sm:$0xff]
      %v950 = vld [vmem:[#allocation8 + $0xe0] sm:$0xff]
      %v951 = vld [vmem:[#allocation8 + $0xe8] sm:$0xff]
      %v952 = vld [vmem:[#allocation8 + $0xf0] sm:$0xff]
      %v953 = vld [vmem:[#allocation8 + $0xf8] sm:$0xff]
      %v954 = vld [vmem:[#allocation8 + $0x100] sm:$0xff]
      %v955 = vld [vmem:[#allocation8 + $0x108] sm:$0xff]
      %v956 = vld [vmem:[#allocation8 + $0x110] sm:$0xff]
      %v957 = vld [vmem:[#allocation8 + $0x118] sm:$0xff]
      %v958 = vld [vmem:[#allocation8 + $0x120] sm:$0xff]
      %v959 = vld [vmem:[#allocation8 + $0x128] sm:$0xff]
      %v960 = vld [vmem:[#allocation8 + $0x130] sm:$0xff]
      %v961 = vld [vmem:[#allocation8 + $0x138] sm:$0xff]
      %v962 = vld [vmem:[#allocation8 + $0x140] sm:$0xff]
      %v963 = vld [vmem:[#allocation8 + $0x148] sm:$0xff]
      %v964 = vld [vmem:[#allocation8 + $0x150] sm:$0xff]
      %v965 = vld [vmem:[#allocation8 + $0x158] sm:$0xff]
      %v966 = vld [vmem:[#allocation8 + $0x160] sm:$0xff]
      %v967 = vld [vmem:[#allocation8 + $0x168] sm:$0xff]
      %v968 = vld [vmem:[#allocation8 + $0x170] sm:$0xff]
      %v969 = vld [vmem:[#allocation8 + $0x178] sm:$0xff]
      %v970 = vld [vmem:[#allocation8 + $0x180] sm:$0xff]
      %v971 = vld [vmem:[#allocation8 + $0x188] sm:$0xff]
      %v972 = vld [vmem:[#allocation8 + $0x190] sm:$0xff]
      %v973 = vld [vmem:[#allocation8 + $0x198] sm:$0xff]
      %v974 = vld [vmem:[#allocation8 + $0x1a0] sm:$0xff]
      %v975 = vld [vmem:[#allocation8 + $0x1a8] sm:$0xff]
      %v976 = vld [vmem:[#allocation8 + $0x1b0] sm:$0xff]
      %v977 = vld [vmem:[#allocation8 + $0x1b8] sm:$0xff]
      %v978 = vld [vmem:[#allocation8 + $0x1c0] sm:$0xff]
      %v979 = vld [vmem:[#allocation8 + $0x1c8] sm:$0xff]
      %v980 = vld [vmem:[#allocation8 + $0x1d0] sm:$0xff]
      %v981 = vld [vmem:[#allocation8 + $0x1d8] sm:$0xff]
      %v982 = vld [vmem:[#allocation8 + $0x1e0] sm:$0xff]
      %v983 = vld [vmem:[#allocation8 + $0x1e8] sm:$0xff]
      %v984 = vld [vmem:[#allocation8 + $0x1f0] sm:$0xff]
      %v985 = vld [vmem:[#allocation8 + $0x1f8] sm:$0xff]
      %v986 = vadd.f32 %v858, %v922
      %v987 = vadd.f32 %v859, %v923
      %v988 = vadd.f32 %v860, %v924
      %v989 = vadd.f32 %v861, %v925
      %v990 = vadd.f32 %v862, %v926
      %v991 = vadd.f32 %v863, %v927
      %v992 = vadd.f32 %v864, %v928
      %v993 = vadd.f32 %v865, %v929
      %v994 = vadd.f32 %v866, %v930
      %v995 = vadd.f32 %v867, %v931
      %v996 = vadd.f32 %v868, %v932
      %v997 = vadd.f32 %v869, %v933
      %v998 = vadd.f32 %v870, %v934
      %v999 = vadd.f32 %v871, %v935
      %v1000 = vadd.f32 %v872, %v936
      %v1001 = vadd.f32 %v873, %v937
      %v1002 = vadd.f32 %v874, %v938
      %v1003 = vadd.f32 %v875, %v939
      %v1004 = vadd.f32 %v876, %v940
      %v1005 = vadd.f32 %v877, %v941
      %v1006 = vadd.f32 %v878, %v942
      %v1007 = vadd.f32 %v879, %v943
      %v1008 = vadd.f32 %v880, %v944
      %v1009 = vadd.f32 %v881, %v945
      %v1010 = vadd.f32 %v882, %v946
      %v1011 = vadd.f32 %v883, %v947
      %v1012 = vadd.f32 %v884, %v948
      %v1013 = vadd.f32 %v885, %v949
      %v1014 = vadd.f32 %v886, %v950
      %v1015 = vadd.f32 %v887, %v951
      %v1016 = vadd.f32 %v888, %v952
      %v1017 = vadd.f32 %v889, %v953
      %v1018 = vadd.f32 %v890, %v954
      %v1019 = vadd.f32 %v891, %v955
      %v1020 = vadd.f32 %v892, %v956
      %v1021 = vadd.f32 %v893, %v957
      %v1022 = vadd.f32 %v894, %v958
      %v1023 = vadd.f32 %v895, %v959
      %v1024 = vadd.f32 %v896, %v960
      %v1025 = vadd.f32 %v897, %v961
      %v1026 = vadd.f32 %v898, %v962
      %v1027 = vadd.f32 %v899, %v963
      %v1028 = vadd.f32 %v900, %v964
      %v1029 = vadd.f32 %v901, %v965
      %v1030 = vadd.f32 %v902, %v966
      %v1031 = vadd.f32 %v903, %v967
      %v1032 = vadd.f32 %v904, %v968
      %v1033 = vadd.f32 %v905, %v969
      %v1034 = vadd.f32 %v906, %v970
      %v1035 = vadd.f32 %v907, %v971
      %v1036 = vadd.f32 %v908, %v972
      %v1037 = vadd.f32 %v909, %v973
      %v1038 = vadd.f32 %v910, %v974
      %v1039 = vadd.f32 %v911, %v975
      %v1040 = vadd.f32 %v912, %v976
      %v1041 = vadd.f32 %v913, %v977
      %v1042 = vadd.f32 %v914, %v978
      %v1043 = vadd.f32 %v915, %v979
      %v1044 = vadd.f32 %v916, %v980
      %v1045 = vadd.f32 %v917, %v981
      %v1046 = vadd.f32 %v918, %v982
      %v1047 = vadd.f32 %v919, %v983
      %v1048 = vadd.f32 %v920, %v984
      %v1049 = vadd.f32 %v921, %v985
      %1050 = vst [vmem:[#allocation9] sm:$0xff] %v986
      %1051 = vst [vmem:[#allocation9 + $0x8] sm:$0xff] %v987
      %1052 = vst [vmem:[#allocation9 + $0x10] sm:$0xff] %v988
      %1053 = vst [vmem:[#allocation9 + $0x18] sm:$0xff] %v989
      %1054 = vst [vmem:[#allocation9 + $0x20] sm:$0xff] %v990
      %1055 = vst [vmem:[#allocation9 + $0x28] sm:$0xff] %v991
      %1056 = vst [vmem:[#allocation9 + $0x30] sm:$0xff] %v992
      %1057 = vst [vmem:[#allocation9 + $0x38] sm:$0xff] %v993
      %1058 = vst [vmem:[#allocation9 + $0x40] sm:$0xff] %v994
      %1059 = vst [vmem:[#allocation9 + $0x48] sm:$0xff] %v995
      %1060 = vst [vmem:[#allocation9 + $0x50] sm:$0xff] %v996
      %1061 = vst [vmem:[#allocation9 + $0x58] sm:$0xff] %v997
      %1062 = vst [vmem:[#allocation9 + $0x60] sm:$0xff] %v998
      %1063 = vst [vmem:[#allocation9 + $0x68] sm:$0xff] %v999
      %1064 = vst [vmem:[#allocation9 + $0x70] sm:$0xff] %v1000
      %1065 = vst [vmem:[#allocation9 + $0x78] sm:$0xff] %v1001
      %1066 = vst [vmem:[#allocation9 + $0x80] sm:$0xff] %v1002
      %1067 = vst [vmem:[#allocation9 + $0x88] sm:$0xff] %v1003
      %1068 = vst [vmem:[#allocation9 + $0x90] sm:$0xff] %v1004
      %1069 = vst [vmem:[#allocation9 + $0x98] sm:$0xff] %v1005
      %1070 = vst [vmem:[#allocation9 + $0xa0] sm:$0xff] %v1006
      %1071 = vst [vmem:[#allocation9 + $0xa8] sm:$0xff] %v1007
      %1072 = vst [vmem:[#allocation9 + $0xb0] sm:$0xff] %v1008
      %1073 = vst [vmem:[#allocation9 + $0xb8] sm:$0xff] %v1009
      %1074 = vst [vmem:[#allocation9 + $0xc0] sm:$0xff] %v1010
      %1075 = vst [vmem:[#allocation9 + $0xc8] sm:$0xff] %v1011
      %1076 = vst [vmem:[#allocation9 + $0xd0] sm:$0xff] %v1012
      %1077 = vst [vmem:[#allocation9 + $0xd8] sm:$0xff] %v1013
      %1078 = vst [vmem:[#allocation9 + $0xe0] sm:$0xff] %v1014
      %1079 = vst [vmem:[#allocation9 + $0xe8] sm:$0xff] %v1015
      %1080 = vst [vmem:[#allocation9 + $0xf0] sm:$0xff] %v1016
      %1081 = vst [vmem:[#allocation9 + $0xf8] sm:$0xff] %v1017
      %1082 = vst [vmem:[#allocation9 + $0x100] sm:$0xff] %v1018
      %1083 = vst [vmem:[#allocation9 + $0x108] sm:$0xff] %v1019
      %1084 = vst [vmem:[#allocation9 + $0x110] sm:$0xff] %v1020
      %1085 = vst [vmem:[#allocation9 + $0x118] sm:$0xff] %v1021
      %1086 = vst [vmem:[#allocation9 + $0x120] sm:$0xff] %v1022
      %1087 = vst [vmem:[#allocation9 + $0x128] sm:$0xff] %v1023
      %1088 = vst [vmem:[#allocation9 + $0x130] sm:$0xff] %v1024
      %1089 = vst [vmem:[#allocation9 + $0x138] sm:$0xff] %v1025
      %1090 = vst [vmem:[#allocation9 + $0x140] sm:$0xff] %v1026
      %1091 = vst [vmem:[#allocation9 + $0x148] sm:$0xff] %v1027
      %1092 = vst [vmem:[#allocation9 + $0x150] sm:$0xff] %v1028
      %1093 = vst [vmem:[#allocation9 + $0x158] sm:$0xff] %v1029
      %1094 = vst [vmem:[#allocation9 + $0x160] sm:$0xff] %v1030
      %1095 = vst [vmem:[#allocation9 + $0x168] sm:$0xff] %v1031
      %1096 = vst [vmem:[#allocation9 + $0x170] sm:$0xff] %v1032
      %1097 = vst [vmem:[#allocation9 + $0x178] sm:$0xff] %v1033
      %1098 = vst [vmem:[#allocation9 + $0x180] sm:$0xff] %v1034
      %1099 = vst [vmem:[#allocation9 + $0x188] sm:$0xff] %v1035
      %1100 = vst [vmem:[#allocation9 + $0x190] sm:$0xff] %v1036
      %1101 = vst [vmem:[#allocation9 + $0x198] sm:$0xff] %v1037
      %1102 = vst [vmem:[#allocation9 + $0x1a0] sm:$0xff] %v1038
      %1103 = vst [vmem:[#allocation9 + $0x1a8] sm:$0xff] %v1039
      %1104 = vst [vmem:[#allocation9 + $0x1b0] sm:$0xff] %v1040
      %1105 = vst [vmem:[#allocation9 + $0x1b8] sm:$0xff] %v1041
      %1106 = vst [vmem:[#allocation9 + $0x1c0] sm:$0xff] %v1042
      %1107 = vst [vmem:[#allocation9 + $0x1c8] sm:$0xff] %v1043
      %1108 = vst [vmem:[#allocation9 + $0x1d0] sm:$0xff] %v1044
      %1109 = vst [vmem:[#allocation9 + $0x1d8] sm:$0xff] %v1045
      %1110 = vst [vmem:[#allocation9 + $0x1e0] sm:$0xff] %v1046
      %1111 = vst [vmem:[#allocation9 + $0x1e8] sm:$0xff] %v1047
      %1112 = vst [vmem:[#allocation9 + $0x1f0] sm:$0xff] %v1048
      %1113 = vst [vmem:[#allocation9 + $0x1f8] sm:$0xff] %v1049
    $region37: #{tpu_custom_call.1} parent=1 // pred_fallthru
      _
    // Predicated region
    $region38: #{tpu_custom_call.1} parent=1 // pred_check
      _
    $region39: #{tpu_custom_call.1} parent=1 // pred_check_branch
      %1115 = sbr.rel (0) target = $region41
    $region40: #{tpu_custom_call.1} parent=1 // pred_region
      %s1117 = ssub.s32 8192, 8192
      %1118 = vsyncadd [#allocation5], %s1117
      %s1119 = sshll.u32 [#allocation9], 4
      %s1120 = int_to_ptr.vmem [resolvable:$true] %s1119
      %1125 = dma.vmem_to_hbm [thread:$0]  %s1120, 8192, %s4, [#allocation5], 128, 128, 8
    $region41: #{tpu_custom_call.1} parent=1 // pred_fallthru
      _
    // Predicated region
    $region42: #{tpu_custom_call.1} parent=1 // pred_check
      _
    $region43: #{tpu_custom_call.1} parent=1 // pred_check_branch
      %1127 = sbr.rel (0) target = $region45
    $region44: #{tpu_custom_call.1} parent=1 // pred_region
      %1128 = dma.done [#allocation5], 8192
    $region45: #{tpu_custom_call.1} parent=1 // pred_fallthru
      _
    %1129 = vsyncpa [#allocation4], 1
    %1130 = vsyncpa [#allocation7], 1
    %1131 = vsyncpa [#allocation5], 1

</llo_original>
